<compile_context>
chip_gen: v6e
topology: v6e:2x2x1
jax: 0.10.0
libtpu: 0.0.40
codegen_flags: <defaults>
</compile_context>

<pallas_src>
import functools

import jax
import jax.numpy as jnp
from jax import lax
from jax.experimental import pallas as pl
from jax.experimental.pallas import tpu as pltpu

EMBED_DIM = 100
HIDDEN = 64                 # per-direction hidden size
NUM_CLASSES = 2
H2 = 2 * HIDDEN             # 128: fused [fwd | bwd] state width
GATES2 = 8 * HIDDEN         # 512: fused gate width (4 gates x 2 directions)


def _bilstm_kernel(pre_ref,            # (CHUNK, B, 512) gate pre-activations
                   whh_ref,            # (128, 512) block-diagonal recurrent weights
                   fcw_ref,            # (128, 2)
                   fcb_ref,            # (1, 2)
                   out_ref,            # (B, 2)
                   h_ref, c_ref):      # scratch (B, 128), persist across grid steps
    chunk = pre_ref.shape[0]

    @pl.when(pl.program_id(0) == 0)
    def _():
        h_ref[...] = jnp.zeros_like(h_ref)
        c_ref[...] = jnp.zeros_like(c_ref)

    # Fully unrolled static inner loop over the time chunk.
    for t in range(chunk):
        # Single fused recurrent matmul for both directions (contraction = 128).
        gates = pre_ref[t] + jnp.dot(h_ref[...], whh_ref[...],
                                     preferred_element_type=jnp.float32)
        # Column layout: [i_f i_b | f_f f_b | o_f o_b | g_f g_b], 64 lanes each.
        sig = jax.nn.sigmoid(gates[:, 0:3 * H2])         # i, f, o in one EUP pass
        g_cat = jnp.tanh(gates[:, 3 * H2:4 * H2])        # g
        i_cat = sig[:, 0 * H2:1 * H2]
        f_cat = sig[:, 1 * H2:2 * H2]
        o_cat = sig[:, 2 * H2:3 * H2]
        c_new = f_cat * c_ref[...] + i_cat * g_cat
        h_ref[...] = o_cat * jnp.tanh(c_new)
        c_ref[...] = c_new

    @pl.when(pl.program_id(0) == pl.num_programs(0) - 1)
    def _():
        logits = jnp.dot(h_ref[...], fcw_ref[...],
                         preferred_element_type=jnp.float32) + fcb_ref[...]
        out_ref[...] = jax.nn.sigmoid(logits)


def _reorder_gates(m):
    """Last-dim gate layout (i, f, g, o) -> (i, f, o, g), 64 columns each."""
    i, f, g, o = jnp.split(m, 4, axis=-1)
    return jnp.concatenate([i, f, o, g], axis=-1)


def _prep_params(p):
    # Input projections (per direction), columns arranged [i, f, o, g].
    wx_f = _reorder_gates(p["w_ih_f"].T)                     # (E, 256)
    wx_b = _reorder_gates(p["w_ih_b"].T)                     # (E, 256)
    b_f = _reorder_gates(p["b_ih_f"] + p["b_hh_f"])          # (256,)
    b_b = _reorder_gates(p["b_ih_b"] + p["b_hh_b"])          # (256,)

    # Block-diagonal fused recurrent weight: rows 0:64 -> fwd, rows 64:128 -> bwd,
    # columns interleaved per gate as [gate_fwd(64) | gate_bwd(64)].
    wh_f = _reorder_gates(p["w_hh_f"].T).reshape(HIDDEN, 4, HIDDEN)
    wh_b = _reorder_gates(p["w_hh_b"].T).reshape(HIDDEN, 4, HIDDEN)
    zeros = jnp.zeros((HIDDEN, 4, HIDDEN), jnp.float32)
    top = jnp.stack([wh_f, zeros], axis=2).reshape(HIDDEN, GATES2)
    bot = jnp.stack([zeros, wh_b], axis=2).reshape(HIDDEN, GATES2)
    whh_cat = jnp.concatenate([top, bot], axis=0)            # (128, 512)

    fcw = p["fc_w"].T                                        # (128, 2)
    fcb = p["fc_b"].reshape(1, -1)                           # (1, 2)
    return wx_f, wx_b, b_f, b_b, whh_cat, fcw, fcb


def _pick_chunk(T, max_chunk=8):
    for c in range(min(T, max_chunk), 0, -1):
        if T % c == 0:
            return c
    return 1


@jax.jit
def lstm_forward(x, p):
    """x: (B, T, E) float32, batch_first like the PyTorch module."""
    B, T, E = x.shape
    x_tm = jnp.transpose(x, (1, 0, 2)).astype(jnp.float32)   # (T, B, E)

    wx_f, wx_b, b_f, b_b, whh_cat, fcw, fcb = _prep_params(p)

    # Hoisted input-to-hidden projection: one big, well-pipelined matmul per
    # direction (bwd direction's inputs pre-reversed in time), biases pre-added.
    pf = jnp.einsum("tbe,eg->tbg", x_tm, wx_f) + b_f          # (T, B, 256)
    pb = jnp.einsum("tbe,eg->tbg", x_tm[::-1], wx_b) + b_b    # (T, B, 256)
    # Interleave gate blocks -> [i_f i_b | f_f f_b | o_f o_b | g_f g_b].
    pre = jnp.stack([pf.reshape(T, B, 4, HIDDEN),
                     pb.reshape(T, B, 4, HIDDEN)], axis=3).reshape(T, B, GATES2)

    chunk = _pick_chunk(T)
    grid = (T // chunk,)

    # TODO(synk): on v7x the two directions could be split across the two
    # TensorCores (core_map / parallel leading axis); kept single-core here.
    return pl.pallas_call(
        _bilstm_kernel,
        out_shape=jax.ShapeDtypeStruct((B, NUM_CLASSES), jnp.float32),
        grid=grid,
        in_specs=[
            pl.BlockSpec((chunk, B, GATES2), lambda c: (c, 0, 0)),
            pl.BlockSpec((H2, GATES2), lambda c: (0, 0)),
            pl.BlockSpec((H2, NUM_CLASSES), lambda c: (0, 0)),
            pl.BlockSpec((1, NUM_CLASSES), lambda c: (0, 0)),
        ],
        out_specs=pl.BlockSpec((B, NUM_CLASSES), lambda c: (0, 0)),
        scratch_shapes=[pltpu.VMEM((B, H2), jnp.float32),
                        pltpu.VMEM((B, H2), jnp.float32)],
        compiler_params=pltpu.CompilerParams(
            dimension_semantics=("arbitrary",)),
    )(pre, whh_cat, fcw, fcb)


def init_params(key):
    """Deterministic init matching the PyTorch module's parameter shapes."""
    ks = jax.random.split(key, 10)
    k_lstm = 1.0 / jnp.sqrt(jnp.float32(HIDDEN))
    k_fc = 1.0 / jnp.sqrt(jnp.float32(2 * HIDDEN))

    def u(k, shape, bound):
        return jax.random.uniform(k, shape, jnp.float32, -bound, bound)

    return dict(
        w_ih_f=u(ks[0], (4 * HIDDEN, EMBED_DIM), k_lstm),
        w_hh_f=u(ks[1], (4 * HIDDEN, HIDDEN), k_lstm),
        b_ih_f=u(ks[2], (4 * HIDDEN,), k_lstm),
        b_hh_f=u(ks[3], (4 * HIDDEN,), k_lstm),
        w_ih_b=u(ks[4], (4 * HIDDEN, EMBED_DIM), k_lstm),
        w_hh_b=u(ks[5], (4 * HIDDEN, HIDDEN), k_lstm),
        b_ih_b=u(ks[6], (4 * HIDDEN,), k_lstm),
        b_hh_b=u(ks[7], (4 * HIDDEN,), k_lstm),
        fc_w=u(ks[8], (NUM_CLASSES, 2 * HIDDEN), k_fc),
        fc_b=u(ks[9], (NUM_CLASSES,), k_fc),
    )


def lstm_ref(x, p):
    """Pure-JAX reference with the same semantics as the PyTorch forward."""
    B, T, E = x.shape

    def run_dir(xs, w_ih, w_hh, b_ih, b_hh):
        def step(carry, x_t):
            h, c = carry
            gates = x_t @ w_ih.T + h @ w_hh.T + b_ih + b_hh
            i, f, g, o = jnp.split(gates, 4, axis=1)
            i = jax.nn.sigmoid(i)
            f = jax.nn.sigmoid(f)
            g = jnp.tanh(g)
            o = jax.nn.sigmoid(o)
            c = f * c + i * g
            h = o * jnp.tanh(c)
            return (h, c), None

        h0 = jnp.zeros((B, HIDDEN), jnp.float32)
        (h, _), _ = lax.scan(step, (h0, h0), xs)
        return h

    xs = jnp.transpose(x, (1, 0, 2))
    h_f = run_dir(xs, p["w_ih_f"], p["w_hh_f"], p["b_ih_f"], p["b_hh_f"])
    h_b = run_dir(xs[::-1], p["w_ih_b"], p["w_hh_b"], p["b_ih_b"], p["b_hh_b"])
    hidden = jnp.concatenate([h_f, h_b], axis=1)  # (B, 128)
    return jax.nn.sigmoid(hidden @ p["fc_w"].T + p["fc_b"])


if __name__ == "__main__":
    # Note: dropout=0.5 in the PyTorch module has no effect with num_layers=1
    # (PyTorch only applies inter-layer dropout), so nothing to translate.
    key = jax.random.PRNGKey(0)
    k_x, k_p = jax.random.split(key)

    B, T = 2, 8
    x = jax.random.normal(k_x, (B, T, EMBED_DIM), jnp.float32)
    params = init_params(k_p)

    out = jax.block_until_ready(lstm_forward(x, params))
    ref = jax.block_until_ready(lstm_ref(x, params))

    assert out.shape == (B, NUM_CLASSES), out.shape
    if not jnp.allclose(out, ref, atol=2e-2, rtol=2e-2):
        raise AssertionError(f"mismatch: pallas={out} ref={ref}")
    print("KERNEL_OK")
</pallas_src>

<mosaic_0001>
module attributes {stable_mosaic.version = 11 : i64} {
  func.func @_bilstm_kernel(%arg0: i32, %arg1: memref<8x2x512xf32, #tpu.memory_space<vmem>>, %arg2: memref<128x512xf32, #tpu.memory_space<vmem>>, %arg3: memref<128x2xf32, #tpu.memory_space<vmem>>, %arg4: memref<1x2xf32, #tpu.memory_space<vmem>>, %arg5: memref<2x2xf32, #tpu.memory_space<vmem>>, %arg6: memref<2x128xf32, #tpu.memory_space<vmem>>, %arg7: memref<2x128xf32, #tpu.memory_space<vmem>>) attributes {dimension_semantics = [#tpu.dimension_semantics<arbitrary>], iteration_bounds = array<i64: 1>, scalar_prefetch = 0 : i64, scratch_operands = 2 : i64, tpu.core_type = #tpu.core_type<tc>, window_params = [{transform_indices = @transform_0, window_bounds = array<i64: 8, 2, 512>}, {pipeline_mode = #tpu.pipeline_mode<synchronous>, transform_indices = @transform_1, window_bounds = array<i64: 128, 512>}, {pipeline_mode = #tpu.pipeline_mode<synchronous>, transform_indices = @transform_2, window_bounds = array<i64: 128, 2>}, {pipeline_mode = #tpu.pipeline_mode<synchronous>, transform_indices = @transform_3, window_bounds = array<i64: 1, 2>}, {pipeline_mode = #tpu.pipeline_mode<synchronous>, transform_indices = @transform_4, window_bounds = array<i64: 2, 2>}]} {
    %c0_i32 = arith.constant 0 : i32
    %0 = arith.cmpi eq, %arg0, %c0_i32 : i32
    %1 = arith.extui %0 : i1 to i32
    %c0_i32_0 = arith.constant 0 : i32
    %2 = arith.cmpi ne, %1, %c0_i32_0 : i32
    scf.if %2 {
      %cst_114 = arith.constant 0.000000e+00 : f32
      %206 = vector.broadcast %cst_114 : f32 to vector<2x128xf32>
      %c0_115 = arith.constant 0 : index
      %c0_116 = arith.constant 0 : index
      %207 = vector.load %arg6[%c0_115, %c0_116] : memref<2x128xf32, #tpu.memory_space<vmem>>, vector<2x128xf32>
      tpu.vector_store %arg6[%c0_115, %c0_116], %206 {strides = array<i32>} : memref<2x128xf32, #tpu.memory_space<vmem>>, vector<2x128xf32>,
      %cst_117 = arith.constant 0.000000e+00 : f32
      %208 = vector.broadcast %cst_117 : f32 to vector<2x128xf32>
      %c0_118 = arith.constant 0 : index
      %c0_119 = arith.constant 0 : index
      %209 = vector.load %arg7[%c0_118, %c0_119] : memref<2x128xf32, #tpu.memory_space<vmem>>, vector<2x128xf32>
      tpu.vector_store %arg7[%c0_118, %c0_119], %208 {strides = array<i32>} : memref<2x128xf32, #tpu.memory_space<vmem>>, vector<2x128xf32>,
    } else {
    }
    %c0 = arith.constant 0 : index
    %c0_1 = arith.constant 0 : index
    %c0_2 = arith.constant 0 : index
    %3 = vector.load %arg1[%c0, %c0_1, %c0_2] : memref<8x2x512xf32, #tpu.memory_space<vmem>>, vector<1x2x512xf32>
    %4 = vector.shape_cast %3 : vector<1x2x512xf32> to vector<2x512xf32>
    %c0_3 = arith.constant 0 : index
    %c0_4 = arith.constant 0 : index
    %5 = vector.load %arg6[%c0_3, %c0_4] : memref<2x128xf32, #tpu.memory_space<vmem>>, vector<2x128xf32>
    %c0_5 = arith.constant 0 : index
    %c0_6 = arith.constant 0 : index
    %6 = vector.load %arg2[%c0_5, %c0_6] : memref<128x512xf32, #tpu.memory_space<vmem>>, vector<128x512xf32>
    %cst = arith.constant dense<0.000000e+00> : vector<2x512xf32>
    %7 = tpu.matmul %5, %6, %cst {dimension_numbers = #tpu.dot_dimension_numbers<[1], [0], [0], [1], [0, 0, 1, 1], [], []>} : vector<2x128xf32>, vector<128x512xf32>, vector<2x512xf32> -> vector<2x512xf32>
    %8 = arith.addf %4, %7 : vector<2x512xf32>
    %9 = vector.extract_strided_slice %8 {offsets = [0, 0], sizes = [2, 384], strides = [1, 1]} : vector<2x512xf32> to vector<2x384xf32>
    %10 = arith.negf %9 : vector<2x384xf32>
    %11 = math.exp %10 : vector<2x384xf32>
    %cst_7 = arith.constant 1.000000e+00 : f32
    %12 = vector.broadcast %cst_7 : f32 to vector<2x384xf32>
    %13 = arith.addf %12, %11 : vector<2x384xf32>
    %14 = arith.divf %12, %13 : vector<2x384xf32>
    %15 = vector.extract_strided_slice %8 {offsets = [0, 384], sizes = [2, 128], strides = [1, 1]} : vector<2x512xf32> to vector<2x128xf32>
    %16 = math.tanh %15 : vector<2x128xf32>
    %17 = vector.extract_strided_slice %14 {offsets = [0, 0], sizes = [2, 128], strides = [1, 1]} : vector<2x384xf32> to vector<2x128xf32>
    %18 = vector.extract_strided_slice %14 {offsets = [0, 128], sizes = [2, 128], strides = [1, 1]} : vector<2x384xf32> to vector<2x128xf32>
    %19 = vector.extract_strided_slice %14 {offsets = [0, 256], sizes = [2, 128], strides = [1, 1]} : vector<2x384xf32> to vector<2x128xf32>
    %c0_8 = arith.constant 0 : index
    %c0_9 = arith.constant 0 : index
    %20 = vector.load %arg7[%c0_8, %c0_9] : memref<2x128xf32, #tpu.memory_space<vmem>>, vector<2x128xf32>
    %21 = arith.mulf %18, %20 : vector<2x128xf32>
    %22 = arith.mulf %17, %16 : vector<2x128xf32>
    %23 = arith.addf %21, %22 : vector<2x128xf32>
    %24 = math.tanh %23 : vector<2x128xf32>
    %25 = arith.mulf %19, %24 : vector<2x128xf32>
    %c0_10 = arith.constant 0 : index
    %c0_11 = arith.constant 0 : index
    %26 = vector.load %arg6[%c0_10, %c0_11] : memref<2x128xf32, #tpu.memory_space<vmem>>, vector<2x128xf32>
    tpu.vector_store %arg6[%c0_10, %c0_11], %25 {strides = array<i32>} : memref<2x128xf32, #tpu.memory_space<vmem>>, vector<2x128xf32>,
    %c0_12 = arith.constant 0 : index
    %c0_13 = arith.constant 0 : index
    %27 = vector.load %arg7[%c0_12, %c0_13] : memref<2x128xf32, #tpu.memory_space<vmem>>, vector<2x128xf32>
    tpu.vector_store %arg7[%c0_12, %c0_13], %23 {strides = array<i32>} : memref<2x128xf32, #tpu.memory_space<vmem>>, vector<2x128xf32>,
    %c1 = arith.constant 1 : index
    %c0_14 = arith.constant 0 : index
    %c0_15 = arith.constant 0 : index
    %28 = vector.load %arg1[%c1, %c0_14, %c0_15] : memref<8x2x512xf32, #tpu.memory_space<vmem>>, vector<1x2x512xf32>
    %29 = vector.shape_cast %28 : vector<1x2x512xf32> to vector<2x512xf32>
    %c0_16 = arith.constant 0 : index
    %c0_17 = arith.constant 0 : index
    %30 = vector.load %arg6[%c0_16, %c0_17] : memref<2x128xf32, #tpu.memory_space<vmem>>, vector<2x128xf32>
    %c0_18 = arith.constant 0 : index
    %c0_19 = arith.constant 0 : index
    %31 = vector.load %arg2[%c0_18, %c0_19] : memref<128x512xf32, #tpu.memory_space<vmem>>, vector<128x512xf32>
    %cst_20 = arith.constant dense<0.000000e+00> : vector<2x512xf32>
    %32 = tpu.matmul %30, %31, %cst_20 {dimension_numbers = #tpu.dot_dimension_numbers<[1], [0], [0], [1], [0, 0, 1, 1], [], []>} : vector<2x128xf32>, vector<128x512xf32>, vector<2x512xf32> -> vector<2x512xf32>
    %33 = arith.addf %29, %32 : vector<2x512xf32>
    %34 = vector.extract_strided_slice %33 {offsets = [0, 0], sizes = [2, 384], strides = [1, 1]} : vector<2x512xf32> to vector<2x384xf32>
    %35 = arith.negf %34 : vector<2x384xf32>
    %36 = math.exp %35 : vector<2x384xf32>
    %cst_21 = arith.constant 1.000000e+00 : f32
    %37 = vector.broadcast %cst_21 : f32 to vector<2x384xf32>
    %38 = arith.addf %37, %36 : vector<2x384xf32>
    %39 = arith.divf %37, %38 : vector<2x384xf32>
    %40 = vector.extract_strided_slice %33 {offsets = [0, 384], sizes = [2, 128], strides = [1, 1]} : vector<2x512xf32> to vector<2x128xf32>
    %41 = math.tanh %40 : vector<2x128xf32>
    %42 = vector.extract_strided_slice %39 {offsets = [0, 0], sizes = [2, 128], strides = [1, 1]} : vector<2x384xf32> to vector<2x128xf32>
    %43 = vector.extract_strided_slice %39 {offsets = [0, 128], sizes = [2, 128], strides = [1, 1]} : vector<2x384xf32> to vector<2x128xf32>
    %44 = vector.extract_strided_slice %39 {offsets = [0, 256], sizes = [2, 128], strides = [1, 1]} : vector<2x384xf32> to vector<2x128xf32>
    %c0_22 = arith.constant 0 : index
    %c0_23 = arith.constant 0 : index
    %45 = vector.load %arg7[%c0_22, %c0_23] : memref<2x128xf32, #tpu.memory_space<vmem>>, vector<2x128xf32>
    %46 = arith.mulf %43, %45 : vector<2x128xf32>
    %47 = arith.mulf %42, %41 : vector<2x128xf32>
    %48 = arith.addf %46, %47 : vector<2x128xf32>
    %49 = math.tanh %48 : vector<2x128xf32>
    %50 = arith.mulf %44, %49 : vector<2x128xf32>
    %c0_24 = arith.constant 0 : index
    %c0_25 = arith.constant 0 : index
    %51 = vector.load %arg6[%c0_24, %c0_25] : memref<2x128xf32, #tpu.memory_space<vmem>>, vector<2x128xf32>
    tpu.vector_store %arg6[%c0_24, %c0_25], %50 {strides = array<i32>} : memref<2x128xf32, #tpu.memory_space<vmem>>, vector<2x128xf32>,
    %c0_26 = arith.constant 0 : index
    %c0_27 = arith.constant 0 : index
    %52 = vector.load %arg7[%c0_26, %c0_27] : memref<2x128xf32, #tpu.memory_space<vmem>>, vector<2x128xf32>
    tpu.vector_store %arg7[%c0_26, %c0_27], %48 {strides = array<i32>} : memref<2x128xf32, #tpu.memory_space<vmem>>, vector<2x128xf32>,
    %c2 = arith.constant 2 : index
    %c0_28 = arith.constant 0 : index
    %c0_29 = arith.constant 0 : index
    %53 = vector.load %arg1[%c2, %c0_28, %c0_29] : memref<8x2x512xf32, #tpu.memory_space<vmem>>, vector<1x2x512xf32>
    %54 = vector.shape_cast %53 : vector<1x2x512xf32> to vector<2x512xf32>
    %c0_30 = arith.constant 0 : index
    %c0_31 = arith.constant 0 : index
    %55 = vector.load %arg6[%c0_30, %c0_31] : memref<2x128xf32, #tpu.memory_space<vmem>>, vector<2x128xf32>
    %c0_32 = arith.constant 0 : index
    %c0_33 = arith.constant 0 : index
    %56 = vector.load %arg2[%c0_32, %c0_33] : memref<128x512xf32, #tpu.memory_space<vmem>>, vector<128x512xf32>
    %cst_34 = arith.constant dense<0.000000e+00> : vector<2x512xf32>
    %57 = tpu.matmul %55, %56, %cst_34 {dimension_numbers = #tpu.dot_dimension_numbers<[1], [0], [0], [1], [0, 0, 1, 1], [], []>} : vector<2x128xf32>, vector<128x512xf32>, vector<2x512xf32> -> vector<2x512xf32>
    %58 = arith.addf %54, %57 : vector<2x512xf32>
    %59 = vector.extract_strided_slice %58 {offsets = [0, 0], sizes = [2, 384], strides = [1, 1]} : vector<2x512xf32> to vector<2x384xf32>
    %60 = arith.negf %59 : vector<2x384xf32>
    %61 = math.exp %60 : vector<2x384xf32>
    %cst_35 = arith.constant 1.000000e+00 : f32
    %62 = vector.broadcast %cst_35 : f32 to vector<2x384xf32>
    %63 = arith.addf %62, %61 : vector<2x384xf32>
    %64 = arith.divf %62, %63 : vector<2x384xf32>
    %65 = vector.extract_strided_slice %58 {offsets = [0, 384], sizes = [2, 128], strides = [1, 1]} : vector<2x512xf32> to vector<2x128xf32>
    %66 = math.tanh %65 : vector<2x128xf32>
    %67 = vector.extract_strided_slice %64 {offsets = [0, 0], sizes = [2, 128], strides = [1, 1]} : vector<2x384xf32> to vector<2x128xf32>
    %68 = vector.extract_strided_slice %64 {offsets = [0, 128], sizes = [2, 128], strides = [1, 1]} : vector<2x384xf32> to vector<2x128xf32>
    %69 = vector.extract_strided_slice %64 {offsets = [0, 256], sizes = [2, 128], strides = [1, 1]} : vector<2x384xf32> to vector<2x128xf32>
    %c0_36 = arith.constant 0 : index
    %c0_37 = arith.constant 0 : index
    %70 = vector.load %arg7[%c0_36, %c0_37] : memref<2x128xf32, #tpu.memory_space<vmem>>, vector<2x128xf32>
    %71 = arith.mulf %68, %70 : vector<2x128xf32>
    %72 = arith.mulf %67, %66 : vector<2x128xf32>
    %73 = arith.addf %71, %72 : vector<2x128xf32>
    %74 = math.tanh %73 : vector<2x128xf32>
    %75 = arith.mulf %69, %74 : vector<2x128xf32>
    %c0_38 = arith.constant 0 : index
    %c0_39 = arith.constant 0 : index
    %76 = vector.load %arg6[%c0_38, %c0_39] : memref<2x128xf32, #tpu.memory_space<vmem>>, vector<2x128xf32>
    tpu.vector_store %arg6[%c0_38, %c0_39], %75 {strides = array<i32>} : memref<2x128xf32, #tpu.memory_space<vmem>>, vector<2x128xf32>,
    %c0_40 = arith.constant 0 : index
    %c0_41 = arith.constant 0 : index
    %77 = vector.load %arg7[%c0_40, %c0_41] : memref<2x128xf32, #tpu.memory_space<vmem>>, vector<2x128xf32>
    tpu.vector_store %arg7[%c0_40, %c0_41], %73 {strides = array<i32>} : memref<2x128xf32, #tpu.memory_space<vmem>>, vector<2x128xf32>,
    %c3 = arith.constant 3 : index
    %c0_42 = arith.constant 0 : index
    %c0_43 = arith.constant 0 : index
    %78 = vector.load %arg1[%c3, %c0_42, %c0_43] : memref<8x2x512xf32, #tpu.memory_space<vmem>>, vector<1x2x512xf32>
    %79 = vector.shape_cast %78 : vector<1x2x512xf32> to vector<2x512xf32>
    %c0_44 = arith.constant 0 : index
    %c0_45 = arith.constant 0 : index
    %80 = vector.load %arg6[%c0_44, %c0_45] : memref<2x128xf32, #tpu.memory_space<vmem>>, vector<2x128xf32>
    %c0_46 = arith.constant 0 : index
    %c0_47 = arith.constant 0 : index
    %81 = vector.load %arg2[%c0_46, %c0_47] : memref<128x512xf32, #tpu.memory_space<vmem>>, vector<128x512xf32>
    %cst_48 = arith.constant dense<0.000000e+00> : vector<2x512xf32>
    %82 = tpu.matmul %80, %81, %cst_48 {dimension_numbers = #tpu.dot_dimension_numbers<[1], [0], [0], [1], [0, 0, 1, 1], [], []>} : vector<2x128xf32>, vector<128x512xf32>, vector<2x512xf32> -> vector<2x512xf32>
    %83 = arith.addf %79, %82 : vector<2x512xf32>
    %84 = vector.extract_strided_slice %83 {offsets = [0, 0], sizes = [2, 384], strides = [1, 1]} : vector<2x512xf32> to vector<2x384xf32>
    %85 = arith.negf %84 : vector<2x384xf32>
    %86 = math.exp %85 : vector<2x384xf32>
    %cst_49 = arith.constant 1.000000e+00 : f32
    %87 = vector.broadcast %cst_49 : f32 to vector<2x384xf32>
    %88 = arith.addf %87, %86 : vector<2x384xf32>
    %89 = arith.divf %87, %88 : vector<2x384xf32>
    %90 = vector.extract_strided_slice %83 {offsets = [0, 384], sizes = [2, 128], strides = [1, 1]} : vector<2x512xf32> to vector<2x128xf32>
    %91 = math.tanh %90 : vector<2x128xf32>
    %92 = vector.extract_strided_slice %89 {offsets = [0, 0], sizes = [2, 128], strides = [1, 1]} : vector<2x384xf32> to vector<2x128xf32>
    %93 = vector.extract_strided_slice %89 {offsets = [0, 128], sizes = [2, 128], strides = [1, 1]} : vector<2x384xf32> to vector<2x128xf32>
    %94 = vector.extract_strided_slice %89 {offsets = [0, 256], sizes = [2, 128], strides = [1, 1]} : vector<2x384xf32> to vector<2x128xf32>
    %c0_50 = arith.constant 0 : index
    %c0_51 = arith.constant 0 : index
    %95 = vector.load %arg7[%c0_50, %c0_51] : memref<2x128xf32, #tpu.memory_space<vmem>>, vector<2x128xf32>
    %96 = arith.mulf %93, %95 : vector<2x128xf32>
    %97 = arith.mulf %92, %91 : vector<2x128xf32>
    %98 = arith.addf %96, %97 : vector<2x128xf32>
    %99 = math.tanh %98 : vector<2x128xf32>
    %100 = arith.mulf %94, %99 : vector<2x128xf32>
    %c0_52 = arith.constant 0 : index
    %c0_53 = arith.constant 0 : index
    %101 = vector.load %arg6[%c0_52, %c0_53] : memref<2x128xf32, #tpu.memory_space<vmem>>, vector<2x128xf32>
    tpu.vector_store %arg6[%c0_52, %c0_53], %100 {strides = array<i32>} : memref<2x128xf32, #tpu.memory_space<vmem>>, vector<2x128xf32>,
    %c0_54 = arith.constant 0 : index
    %c0_55 = arith.constant 0 : index
    %102 = vector.load %arg7[%c0_54, %c0_55] : memref<2x128xf32, #tpu.memory_space<vmem>>, vector<2x128xf32>
    tpu.vector_store %arg7[%c0_54, %c0_55], %98 {strides = array<i32>} : memref<2x128xf32, #tpu.memory_space<vmem>>, vector<2x128xf32>,
    %c4 = arith.constant 4 : index
    %c0_56 = arith.constant 0 : index
    %c0_57 = arith.constant 0 : index
    %103 = vector.load %arg1[%c4, %c0_56, %c0_57] : memref<8x2x512xf32, #tpu.memory_space<vmem>>, vector<1x2x512xf32>
    %104 = vector.shape_cast %103 : vector<1x2x512xf32> to vector<2x512xf32>
    %c0_58 = arith.constant 0 : index
    %c0_59 = arith.constant 0 : index
    %105 = vector.load %arg6[%c0_58, %c0_59] : memref<2x128xf32, #tpu.memory_space<vmem>>, vector<2x128xf32>
    %c0_60 = arith.constant 0 : index
    %c0_61 = arith.constant 0 : index
    %106 = vector.load %arg2[%c0_60, %c0_61] : memref<128x512xf32, #tpu.memory_space<vmem>>, vector<128x512xf32>
    %cst_62 = arith.constant dense<0.000000e+00> : vector<2x512xf32>
    %107 = tpu.matmul %105, %106, %cst_62 {dimension_numbers = #tpu.dot_dimension_numbers<[1], [0], [0], [1], [0, 0, 1, 1], [], []>} : vector<2x128xf32>, vector<128x512xf32>, vector<2x512xf32> -> vector<2x512xf32>
    %108 = arith.addf %104, %107 : vector<2x512xf32>
    %109 = vector.extract_strided_slice %108 {offsets = [0, 0], sizes = [2, 384], strides = [1, 1]} : vector<2x512xf32> to vector<2x384xf32>
    %110 = arith.negf %109 : vector<2x384xf32>
    %111 = math.exp %110 : vector<2x384xf32>
    %cst_63 = arith.constant 1.000000e+00 : f32
    %112 = vector.broadcast %cst_63 : f32 to vector<2x384xf32>
    %113 = arith.addf %112, %111 : vector<2x384xf32>
    %114 = arith.divf %112, %113 : vector<2x384xf32>
    %115 = vector.extract_strided_slice %108 {offsets = [0, 384], sizes = [2, 128], strides = [1, 1]} : vector<2x512xf32> to vector<2x128xf32>
    %116 = math.tanh %115 : vector<2x128xf32>
    %117 = vector.extract_strided_slice %114 {offsets = [0, 0], sizes = [2, 128], strides = [1, 1]} : vector<2x384xf32> to vector<2x128xf32>
    %118 = vector.extract_strided_slice %114 {offsets = [0, 128], sizes = [2, 128], strides = [1, 1]} : vector<2x384xf32> to vector<2x128xf32>
    %119 = vector.extract_strided_slice %114 {offsets = [0, 256], sizes = [2, 128], strides = [1, 1]} : vector<2x384xf32> to vector<2x128xf32>
    %c0_64 = arith.constant 0 : index
    %c0_65 = arith.constant 0 : index
    %120 = vector.load %arg7[%c0_64, %c0_65] : memref<2x128xf32, #tpu.memory_space<vmem>>, vector<2x128xf32>
    %121 = arith.mulf %118, %120 : vector<2x128xf32>
    %122 = arith.mulf %117, %116 : vector<2x128xf32>
    %123 = arith.addf %121, %122 : vector<2x128xf32>
    %124 = math.tanh %123 : vector<2x128xf32>
    %125 = arith.mulf %119, %124 : vector<2x128xf32>
    %c0_66 = arith.constant 0 : index
    %c0_67 = arith.constant 0 : index
    %126 = vector.load %arg6[%c0_66, %c0_67] : memref<2x128xf32, #tpu.memory_space<vmem>>, vector<2x128xf32>
    tpu.vector_store %arg6[%c0_66, %c0_67], %125 {strides = array<i32>} : memref<2x128xf32, #tpu.memory_space<vmem>>, vector<2x128xf32>,
    %c0_68 = arith.constant 0 : index
    %c0_69 = arith.constant 0 : index
    %127 = vector.load %arg7[%c0_68, %c0_69] : memref<2x128xf32, #tpu.memory_space<vmem>>, vector<2x128xf32>
    tpu.vector_store %arg7[%c0_68, %c0_69], %123 {strides = array<i32>} : memref<2x128xf32, #tpu.memory_space<vmem>>, vector<2x128xf32>,
    %c5 = arith.constant 5 : index
    %c0_70 = arith.constant 0 : index
    %c0_71 = arith.constant 0 : index
    %128 = vector.load %arg1[%c5, %c0_70, %c0_71] : memref<8x2x512xf32, #tpu.memory_space<vmem>>, vector<1x2x512xf32>
    %129 = vector.shape_cast %128 : vector<1x2x512xf32> to vector<2x512xf32>
    %c0_72 = arith.constant 0 : index
    %c0_73 = arith.constant 0 : index
    %130 = vector.load %arg6[%c0_72, %c0_73] : memref<2x128xf32, #tpu.memory_space<vmem>>, vector<2x128xf32>
    %c0_74 = arith.constant 0 : index
    %c0_75 = arith.constant 0 : index
    %131 = vector.load %arg2[%c0_74, %c0_75] : memref<128x512xf32, #tpu.memory_space<vmem>>, vector<128x512xf32>
    %cst_76 = arith.constant dense<0.000000e+00> : vector<2x512xf32>
    %132 = tpu.matmul %130, %131, %cst_76 {dimension_numbers = #tpu.dot_dimension_numbers<[1], [0], [0], [1], [0, 0, 1, 1], [], []>} : vector<2x128xf32>, vector<128x512xf32>, vector<2x512xf32> -> vector<2x512xf32>
    %133 = arith.addf %129, %132 : vector<2x512xf32>
    %134 = vector.extract_strided_slice %133 {offsets = [0, 0], sizes = [2, 384], strides = [1, 1]} : vector<2x512xf32> to vector<2x384xf32>
    %135 = arith.negf %134 : vector<2x384xf32>
    %136 = math.exp %135 : vector<2x384xf32>
    %cst_77 = arith.constant 1.000000e+00 : f32
    %137 = vector.broadcast %cst_77 : f32 to vector<2x384xf32>
    %138 = arith.addf %137, %136 : vector<2x384xf32>
    %139 = arith.divf %137, %138 : vector<2x384xf32>
    %140 = vector.extract_strided_slice %133 {offsets = [0, 384], sizes = [2, 128], strides = [1, 1]} : vector<2x512xf32> to vector<2x128xf32>
    %141 = math.tanh %140 : vector<2x128xf32>
    %142 = vector.extract_strided_slice %139 {offsets = [0, 0], sizes = [2, 128], strides = [1, 1]} : vector<2x384xf32> to vector<2x128xf32>
    %143 = vector.extract_strided_slice %139 {offsets = [0, 128], sizes = [2, 128], strides = [1, 1]} : vector<2x384xf32> to vector<2x128xf32>
    %144 = vector.extract_strided_slice %139 {offsets = [0, 256], sizes = [2, 128], strides = [1, 1]} : vector<2x384xf32> to vector<2x128xf32>
    %c0_78 = arith.constant 0 : index
    %c0_79 = arith.constant 0 : index
    %145 = vector.load %arg7[%c0_78, %c0_79] : memref<2x128xf32, #tpu.memory_space<vmem>>, vector<2x128xf32>
    %146 = arith.mulf %143, %145 : vector<2x128xf32>
    %147 = arith.mulf %142, %141 : vector<2x128xf32>
    %148 = arith.addf %146, %147 : vector<2x128xf32>
    %149 = math.tanh %148 : vector<2x128xf32>
    %150 = arith.mulf %144, %149 : vector<2x128xf32>
    %c0_80 = arith.constant 0 : index
    %c0_81 = arith.constant 0 : index
    %151 = vector.load %arg6[%c0_80, %c0_81] : memref<2x128xf32, #tpu.memory_space<vmem>>, vector<2x128xf32>
    tpu.vector_store %arg6[%c0_80, %c0_81], %150 {strides = array<i32>} : memref<2x128xf32, #tpu.memory_space<vmem>>, vector<2x128xf32>,
    %c0_82 = arith.constant 0 : index
    %c0_83 = arith.constant 0 : index
    %152 = vector.load %arg7[%c0_82, %c0_83] : memref<2x128xf32, #tpu.memory_space<vmem>>, vector<2x128xf32>
    tpu.vector_store %arg7[%c0_82, %c0_83], %148 {strides = array<i32>} : memref<2x128xf32, #tpu.memory_space<vmem>>, vector<2x128xf32>,
    %c6 = arith.constant 6 : index
    %c0_84 = arith.constant 0 : index
    %c0_85 = arith.constant 0 : index
    %153 = vector.load %arg1[%c6, %c0_84, %c0_85] : memref<8x2x512xf32, #tpu.memory_space<vmem>>, vector<1x2x512xf32>
    %154 = vector.shape_cast %153 : vector<1x2x512xf32> to vector<2x512xf32>
    %c0_86 = arith.constant 0 : index
    %c0_87 = arith.constant 0 : index
    %155 = vector.load %arg6[%c0_86, %c0_87] : memref<2x128xf32, #tpu.memory_space<vmem>>, vector<2x128xf32>
    %c0_88 = arith.constant 0 : index
    %c0_89 = arith.constant 0 : index
    %156 = vector.load %arg2[%c0_88, %c0_89] : memref<128x512xf32, #tpu.memory_space<vmem>>, vector<128x512xf32>
    %cst_90 = arith.constant dense<0.000000e+00> : vector<2x512xf32>
    %157 = tpu.matmul %155, %156, %cst_90 {dimension_numbers = #tpu.dot_dimension_numbers<[1], [0], [0], [1], [0, 0, 1, 1], [], []>} : vector<2x128xf32>, vector<128x512xf32>, vector<2x512xf32> -> vector<2x512xf32>
    %158 = arith.addf %154, %157 : vector<2x512xf32>
    %159 = vector.extract_strided_slice %158 {offsets = [0, 0], sizes = [2, 384], strides = [1, 1]} : vector<2x512xf32> to vector<2x384xf32>
    %160 = arith.negf %159 : vector<2x384xf32>
    %161 = math.exp %160 : vector<2x384xf32>
    %cst_91 = arith.constant 1.000000e+00 : f32
    %162 = vector.broadcast %cst_91 : f32 to vector<2x384xf32>
    %163 = arith.addf %162, %161 : vector<2x384xf32>
    %164 = arith.divf %162, %163 : vector<2x384xf32>
    %165 = vector.extract_strided_slice %158 {offsets = [0, 384], sizes = [2, 128], strides = [1, 1]} : vector<2x512xf32> to vector<2x128xf32>
    %166 = math.tanh %165 : vector<2x128xf32>
    %167 = vector.extract_strided_slice %164 {offsets = [0, 0], sizes = [2, 128], strides = [1, 1]} : vector<2x384xf32> to vector<2x128xf32>
    %168 = vector.extract_strided_slice %164 {offsets = [0, 128], sizes = [2, 128], strides = [1, 1]} : vector<2x384xf32> to vector<2x128xf32>
    %169 = vector.extract_strided_slice %164 {offsets = [0, 256], sizes = [2, 128], strides = [1, 1]} : vector<2x384xf32> to vector<2x128xf32>
    %c0_92 = arith.constant 0 : index
    %c0_93 = arith.constant 0 : index
    %170 = vector.load %arg7[%c0_92, %c0_93] : memref<2x128xf32, #tpu.memory_space<vmem>>, vector<2x128xf32>
    %171 = arith.mulf %168, %170 : vector<2x128xf32>
    %172 = arith.mulf %167, %166 : vector<2x128xf32>
    %173 = arith.addf %171, %172 : vector<2x128xf32>
    %174 = math.tanh %173 : vector<2x128xf32>
    %175 = arith.mulf %169, %174 : vector<2x128xf32>
    %c0_94 = arith.constant 0 : index
    %c0_95 = arith.constant 0 : index
    %176 = vector.load %arg6[%c0_94, %c0_95] : memref<2x128xf32, #tpu.memory_space<vmem>>, vector<2x128xf32>
    tpu.vector_store %arg6[%c0_94, %c0_95], %175 {strides = array<i32>} : memref<2x128xf32, #tpu.memory_space<vmem>>, vector<2x128xf32>,
    %c0_96 = arith.constant 0 : index
    %c0_97 = arith.constant 0 : index
    %177 = vector.load %arg7[%c0_96, %c0_97] : memref<2x128xf32, #tpu.memory_space<vmem>>, vector<2x128xf32>
    tpu.vector_store %arg7[%c0_96, %c0_97], %173 {strides = array<i32>} : memref<2x128xf32, #tpu.memory_space<vmem>>, vector<2x128xf32>,
    %c7 = arith.constant 7 : index
    %c0_98 = arith.constant 0 : index
    %c0_99 = arith.constant 0 : index
    %178 = vector.load %arg1[%c7, %c0_98, %c0_99] : memref<8x2x512xf32, #tpu.memory_space<vmem>>, vector<1x2x512xf32>
    %179 = vector.shape_cast %178 : vector<1x2x512xf32> to vector<2x512xf32>
    %c0_100 = arith.constant 0 : index
    %c0_101 = arith.constant 0 : index
    %180 = vector.load %arg6[%c0_100, %c0_101] : memref<2x128xf32, #tpu.memory_space<vmem>>, vector<2x128xf32>
    %c0_102 = arith.constant 0 : index
    %c0_103 = arith.constant 0 : index
    %181 = vector.load %arg2[%c0_102, %c0_103] : memref<128x512xf32, #tpu.memory_space<vmem>>, vector<128x512xf32>
    %cst_104 = arith.constant dense<0.000000e+00> : vector<2x512xf32>
    %182 = tpu.matmul %180, %181, %cst_104 {dimension_numbers = #tpu.dot_dimension_numbers<[1], [0], [0], [1], [0, 0, 1, 1], [], []>} : vector<2x128xf32>, vector<128x512xf32>, vector<2x512xf32> -> vector<2x512xf32>
    %183 = arith.addf %179, %182 : vector<2x512xf32>
    %184 = vector.extract_strided_slice %183 {offsets = [0, 0], sizes = [2, 384], strides = [1, 1]} : vector<2x512xf32> to vector<2x384xf32>
    %185 = arith.negf %184 : vector<2x384xf32>
    %186 = math.exp %185 : vector<2x384xf32>
    %cst_105 = arith.constant 1.000000e+00 : f32
    %187 = vector.broadcast %cst_105 : f32 to vector<2x384xf32>
    %188 = arith.addf %187, %186 : vector<2x384xf32>
    %189 = arith.divf %187, %188 : vector<2x384xf32>
    %190 = vector.extract_strided_slice %183 {offsets = [0, 384], sizes = [2, 128], strides = [1, 1]} : vector<2x512xf32> to vector<2x128xf32>
    %191 = math.tanh %190 : vector<2x128xf32>
    %192 = vector.extract_strided_slice %189 {offsets = [0, 0], sizes = [2, 128], strides = [1, 1]} : vector<2x384xf32> to vector<2x128xf32>
    %193 = vector.extract_strided_slice %189 {offsets = [0, 128], sizes = [2, 128], strides = [1, 1]} : vector<2x384xf32> to vector<2x128xf32>
    %194 = vector.extract_strided_slice %189 {offsets = [0, 256], sizes = [2, 128], strides = [1, 1]} : vector<2x384xf32> to vector<2x128xf32>
    %c0_106 = arith.constant 0 : index
    %c0_107 = arith.constant 0 : index
    %195 = vector.load %arg7[%c0_106, %c0_107] : memref<2x128xf32, #tpu.memory_space<vmem>>, vector<2x128xf32>
    %196 = arith.mulf %193, %195 : vector<2x128xf32>
    %197 = arith.mulf %192, %191 : vector<2x128xf32>
    %198 = arith.addf %196, %197 : vector<2x128xf32>
    %199 = math.tanh %198 : vector<2x128xf32>
    %200 = arith.mulf %194, %199 : vector<2x128xf32>
    %c0_108 = arith.constant 0 : index
    %c0_109 = arith.constant 0 : index
    %201 = vector.load %arg6[%c0_108, %c0_109] : memref<2x128xf32, #tpu.memory_space<vmem>>, vector<2x128xf32>
    tpu.vector_store %arg6[%c0_108, %c0_109], %200 {strides = array<i32>} : memref<2x128xf32, #tpu.memory_space<vmem>>, vector<2x128xf32>,
    %c0_110 = arith.constant 0 : index
    %c0_111 = arith.constant 0 : index
    %202 = vector.load %arg7[%c0_110, %c0_111] : memref<2x128xf32, #tpu.memory_space<vmem>>, vector<2x128xf32>
    tpu.vector_store %arg7[%c0_110, %c0_111], %198 {strides = array<i32>} : memref<2x128xf32, #tpu.memory_space<vmem>>, vector<2x128xf32>,
    %c0_i32_112 = arith.constant 0 : i32
    %203 = arith.cmpi eq, %arg0, %c0_i32_112 : i32
    %204 = arith.extui %203 : i1 to i32
    %c0_i32_113 = arith.constant 0 : i32
    %205 = arith.cmpi ne, %204, %c0_i32_113 : i32
    scf.if %205 {
      %c0_114 = arith.constant 0 : index
      %c0_115 = arith.constant 0 : index
      %206 = vector.load %arg6[%c0_114, %c0_115] : memref<2x128xf32, #tpu.memory_space<vmem>>, vector<2x128xf32>
      %c0_116 = arith.constant 0 : index
      %c0_117 = arith.constant 0 : index
      %207 = vector.load %arg3[%c0_116, %c0_117] : memref<128x2xf32, #tpu.memory_space<vmem>>, vector<128x2xf32>
      %cst_118 = arith.constant dense<0.000000e+00> : vector<2x2xf32>
      %208 = tpu.matmul %206, %207, %cst_118 {dimension_numbers = #tpu.dot_dimension_numbers<[1], [0], [0], [1], [0, 0, 1, 1], [], []>} : vector<2x128xf32>, vector<128x2xf32>, vector<2x2xf32> -> vector<2x2xf32>
      %c0_119 = arith.constant 0 : index
      %c0_120 = arith.constant 0 : index
      %209 = vector.load %arg4[%c0_119, %c0_120] : memref<1x2xf32, #tpu.memory_space<vmem>>, vector<1x2xf32>
      %210 = vector.broadcast %209 : vector<1x2xf32> to vector<2x2xf32>
      %211 = arith.addf %208, %210 : vector<2x2xf32>
      %212 = arith.negf %211 : vector<2x2xf32>
      %213 = math.exp %212 : vector<2x2xf32>
      %cst_121 = arith.constant 1.000000e+00 : f32
      %214 = vector.broadcast %cst_121 : f32 to vector<2x2xf32>
      %215 = arith.addf %214, %213 : vector<2x2xf32>
      %216 = arith.divf %214, %215 : vector<2x2xf32>
      %c0_122 = arith.constant 0 : index
      %c0_123 = arith.constant 0 : index
      %217 = vector.load %arg5[%c0_122, %c0_123] : memref<2x2xf32, #tpu.memory_space<vmem>>, vector<2x2xf32>
      tpu.vector_store %arg5[%c0_122, %c0_123], %216 {strides = array<i32>} : memref<2x2xf32, #tpu.memory_space<vmem>>, vector<2x2xf32>,
    } else {
    }
    return
  }
  func.func @transform_0(%arg0: i32) -> (i32, i32, i32) {
    %c0_i32 = arith.constant 0 : i32
    %c0_i32_0 = arith.constant 0 : i32
    %c0_i32_1 = arith.constant 0 : i32
    return %arg0, %c0_i32, %c0_i32_0 : i32, i32, i32
  }
  func.func @transform_1(%arg0: i32) -> (i32, i32) {
    %c0_i32 = arith.constant 0 : i32
    %c0_i32_0 = arith.constant 0 : i32
    %c0_i32_1 = arith.constant 0 : i32
    return %c0_i32, %c0_i32_0 : i32, i32
  }
  func.func @transform_2(%arg0: i32) -> (i32, i32) {
    %c0_i32 = arith.constant 0 : i32
    %c0_i32_0 = arith.constant 0 : i32
    %c0_i32_1 = arith.constant 0 : i32
    return %c0_i32, %c0_i32_0 : i32, i32
  }
  func.func @transform_3(%arg0: i32) -> (i32, i32) {
    %c0_i32 = arith.constant 0 : i32
    %c0_i32_0 = arith.constant 0 : i32
    %c0_i32_1 = arith.constant 0 : i32
    return %c0_i32, %c0_i32_0 : i32, i32
  }
  func.func @transform_4(%arg0: i32) -> (i32, i32) {
    %c0_i32 = arith.constant 0 : i32
    %c0_i32_0 = arith.constant 0 : i32
    %c0_i32_1 = arith.constant 0 : i32
    return %c0_i32, %c0_i32_0 : i32, i32
  }
}

</mosaic_0001>

<llo_original>
// kernel: lstm_forward.1
$region0: #{lstm_forward.1}
  #allocation0 [shape = 'u32[]', space=smem, size = 0x4, offset = 0x4, fixed_abs, tag = 'smem constant byte address 0x4 - core index']
  #allocation1 [shape = 'u32[144,128]{1,0:T(1,128)}', space=vmem, size = 0x12000, scoped, tag = 'internal scratch']
  #allocation2 [shape = 'f32[2,128]{1,0:T(2,128)}', space=vmem, size = 0x400, scoped, tag = 'scratch operand']
  #allocation3 [shape = 'f32[2,128]{1,0:T(2,128)}', space=vmem, size = 0x400, scoped, tag = 'scratch operand']
  %s0 = inlined_call_operand.vmem [shape: f32[8,2,512], index: 0, kind: input, shape index: {}]
  %s1 = inlined_call_operand.vmem [shape: f32[128,512], index: 1, kind: input, shape index: {}]
  %s2 = inlined_call_operand.vmem [shape: f32[128,2], index: 2, kind: input, shape index: {}]
  %s3 = inlined_call_operand.vmem [shape: f32[1,2], index: 3, kind: input, shape index: {}]
  %s4 = inlined_call_operand.hbm [shape: f32[2,2], index: 4, kind: output, shape index: {}]
  %s5 = sld [smem:[#allocation0]]
  $region34: #{lstm_forward.1} parent=0
    _
  %s7 = ssub.s32 1, %s5
  %s8 = scalar_select 0, %s7, %s5
  $region1: #{lstm_forward.1} parent=0
    #allocation4 [shape = 'u8[1024]{0}', space=vmem, size = 0x400, scoped, tag = 'output window, operand 0, single buffered']
    #allocation5 [shape = 's32[1]{0}', space=sflag, size = 0x4, scoped, tag = 'scoped memory for lstm_forward.1']
    %9 = vsyncpa [#allocation5], 0
    // Predicated region
    $region2: #{lstm_forward.1} parent=1 // pred_check
      _
    $region3: #{lstm_forward.1} parent=1 // pred_check_branch
      %11 = sbr.rel (0) target = $region5
    $region4: #{lstm_forward.1} parent=1 // pred_region
      _
    $region5: #{lstm_forward.1} parent=1 // pred_fallthru
      _
    // Predicated region
    $region6: #{lstm_forward.1} parent=1 // pred_check
      _
    $region7: #{lstm_forward.1} parent=1 // pred_check_branch
      %13 = sbr.rel (0) target = $region9
    $region8: #{lstm_forward.1} parent=1 // pred_region
      _
    $region9: #{lstm_forward.1} parent=1 // pred_fallthru
      _
    // Predicated region
    $region10: #{lstm_forward.1} parent=1 // pred_check
      _
    $region11: #{lstm_forward.1} parent=1 // pred_check_branch
      %15 = sbr.rel (0) target = $region13
    $region12: #{lstm_forward.1} parent=1 // pred_region
      _
    $region13: #{lstm_forward.1} parent=1 // pred_fallthru
      _
    // Predicated region
    $region14: #{lstm_forward.1} parent=1 // pred_check
      _
    $region15: #{lstm_forward.1} parent=1 // pred_check_branch
      %17 = sbr.rel (0) target = $region17
    $region16: #{lstm_forward.1} parent=1 // pred_region
      _
    $region17: #{lstm_forward.1} parent=1 // pred_fallthru
      _
    %p18 = scmp.eq.s32.totalorder 0, 0
    // Predicated region
    $region18: #{lstm_forward.1} parent=1 // pred_check
      %p19 = pneg %p18
    $region19: #{lstm_forward.1} parent=1 // pred_check_branch
      %21 = sbr.rel (%p19) target = $region21
    $region20: #{lstm_forward.1} parent=1 // pred_region
      %22 = vst [vmem:[#allocation2] sm:$0x3] 0.0
      %23 = vst [vmem:[#allocation3] sm:$0x3] 0.0
    $region21: #{lstm_forward.1} parent=1 // pred_fallthru
      _
    %v24 = vld [vmem:[%s0] sm:$0xff]
    %v25 = vld [vmem:[#allocation2] sm:$0x3]
    %v26 = vld [vmem:[%s1] sm:$0xff]
    %v27 = vld [vmem:[%s1 + $0x8] sm:$0xff]
    %v28 = vld [vmem:[%s1 + $0x10] sm:$0xff]
    %v29 = vld [vmem:[%s1 + $0x18] sm:$0xff]
    %v30 = vld [vmem:[%s1 + $0x20] sm:$0xff]
    %v31 = vld [vmem:[%s1 + $0x28] sm:$0xff]
    %v32 = vld [vmem:[%s1 + $0x30] sm:$0xff]
    %v33 = vld [vmem:[%s1 + $0x38] sm:$0xff]
    %v34 = vld [vmem:[%s1 + $0x40] sm:$0xff]
    %v35 = vld [vmem:[%s1 + $0x48] sm:$0xff]
    %v36 = vld [vmem:[%s1 + $0x50] sm:$0xff]
    %v37 = vld [vmem:[%s1 + $0x58] sm:$0xff]
    %v38 = vld [vmem:[%s1 + $0x60] sm:$0xff]
    %v39 = vld [vmem:[%s1 + $0x68] sm:$0xff]
    %v40 = vld [vmem:[%s1 + $0x70] sm:$0xff]
    %v41 = vld [vmem:[%s1 + $0x78] sm:$0xff]
    %v42 = vld [vmem:[%s1 + $0x80] sm:$0xff]
    %v43 = vld [vmem:[%s1 + $0x88] sm:$0xff]
    %v44 = vld [vmem:[%s1 + $0x90] sm:$0xff]
    %v45 = vld [vmem:[%s1 + $0x98] sm:$0xff]
    %v46 = vld [vmem:[%s1 + $0xa0] sm:$0xff]
    %v47 = vld [vmem:[%s1 + $0xa8] sm:$0xff]
    %v48 = vld [vmem:[%s1 + $0xb0] sm:$0xff]
    %v49 = vld [vmem:[%s1 + $0xb8] sm:$0xff]
    %v50 = vld [vmem:[%s1 + $0xc0] sm:$0xff]
    %v51 = vld [vmem:[%s1 + $0xc8] sm:$0xff]
    %v52 = vld [vmem:[%s1 + $0xd0] sm:$0xff]
    %v53 = vld [vmem:[%s1 + $0xd8] sm:$0xff]
    %v54 = vld [vmem:[%s1 + $0xe0] sm:$0xff]
    %v55 = vld [vmem:[%s1 + $0xe8] sm:$0xff]
    %v56 = vld [vmem:[%s1 + $0xf0] sm:$0xff]
    %v57 = vld [vmem:[%s1 + $0xf8] sm:$0xff]
    %v58 = vld [vmem:[%s1 + $0x100] sm:$0xff]
    %v59 = vld [vmem:[%s1 + $0x108] sm:$0xff]
    %v60 = vld [vmem:[%s1 + $0x110] sm:$0xff]
    %v61 = vld [vmem:[%s1 + $0x118] sm:$0xff]
    %v62 = vld [vmem:[%s1 + $0x120] sm:$0xff]
    %v63 = vld [vmem:[%s1 + $0x128] sm:$0xff]
    %v64 = vld [vmem:[%s1 + $0x130] sm:$0xff]
    %v65 = vld [vmem:[%s1 + $0x138] sm:$0xff]
    %v66 = vld [vmem:[%s1 + $0x140] sm:$0xff]
    %v67 = vld [vmem:[%s1 + $0x148] sm:$0xff]
    %v68 = vld [vmem:[%s1 + $0x150] sm:$0xff]
    %v69 = vld [vmem:[%s1 + $0x158] sm:$0xff]
    %v70 = vld [vmem:[%s1 + $0x160] sm:$0xff]
    %v71 = vld [vmem:[%s1 + $0x168] sm:$0xff]
    %v72 = vld [vmem:[%s1 + $0x170] sm:$0xff]
    %v73 = vld [vmem:[%s1 + $0x178] sm:$0xff]
    %v74 = vld [vmem:[%s1 + $0x180] sm:$0xff]
    %v75 = vld [vmem:[%s1 + $0x188] sm:$0xff]
    %v76 = vld [vmem:[%s1 + $0x190] sm:$0xff]
    %v77 = vld [vmem:[%s1 + $0x198] sm:$0xff]
    %v78 = vld [vmem:[%s1 + $0x1a0] sm:$0xff]
    %v79 = vld [vmem:[%s1 + $0x1a8] sm:$0xff]
    %v80 = vld [vmem:[%s1 + $0x1b0] sm:$0xff]
    %v81 = vld [vmem:[%s1 + $0x1b8] sm:$0xff]
    %v82 = vld [vmem:[%s1 + $0x1c0] sm:$0xff]
    %v83 = vld [vmem:[%s1 + $0x1c8] sm:$0xff]
    %v84 = vld [vmem:[%s1 + $0x1d0] sm:$0xff]
    %v85 = vld [vmem:[%s1 + $0x1d8] sm:$0xff]
    %v86 = vld [vmem:[%s1 + $0x1e0] sm:$0xff]
    %v87 = vld [vmem:[%s1 + $0x1e8] sm:$0xff]
    %v88 = vld [vmem:[%s1 + $0x1f0] sm:$0xff]
    %v89 = vld [vmem:[%s1 + $0x1f8] sm:$0xff]
    %90 = vmatprep.subr.mxu0 %v87
    %91 = vmatpush1.msra.mxu0 %v86
    %92 = vmatprep.subr.mxu0 %v83
    %93 = vmatpush1.msra.mxu0 %v82
    %94 = vmatprep.subr.mxu0 %v79
    %95 = vmatpush1.msra.mxu0 %v78
    %96 = vmatprep.subr.mxu0 %v75
    %97 = vmatpush1.msra.mxu0 %v74
    %98 = vmatprep.subr.mxu0 %v71
    %99 = vmatpush1.msra.mxu0 %v70
    %100 = vmatprep.subr.mxu0 %v67
    %101 = vmatpush1.msra.mxu0 %v66
    %102 = vmatprep.subr.mxu0 %v63
    %103 = vmatpush1.msra.mxu0 %v62
    %104 = vmatprep.subr.mxu0 %v59
    %105 = vmatpush1.msra.mxu0 %v58
    %106 = vmatprep.subr.mxu0 %v55
    %107 = vmatpush1.msra.mxu0 %v54
    %108 = vmatprep.subr.mxu0 %v51
    %109 = vmatpush1.msra.mxu0 %v50
    %110 = vmatprep.subr.mxu0 %v47
    %111 = vmatpush1.msra.mxu0 %v46
    %112 = vmatprep.subr.mxu0 %v43
    %113 = vmatpush1.msra.mxu0 %v42
    %114 = vmatprep.subr.mxu0 %v39
    %115 = vmatpush1.msra.mxu0 %v38
    %116 = vmatprep.subr.mxu0 %v35
    %117 = vmatpush1.msra.mxu0 %v34
    %118 = vmatprep.subr.mxu0 %v31
    %119 = vmatpush1.msra.mxu0 %v30
    %120 = vmatprep.subr.mxu0 %v27
    %121 = vmatpush1.msra.mxu0 %v26
    %122 = vmatprep.subr.mxu0 0.0
    %123 = vmatpush2.msra.mxu0 0.0
    %124 = vmatprep.subr.mxu0 0.0
    %125 = vmatpush2.msra.mxu0 0.0
    %126 = vmatprep.subr.mxu0 0.0
    %127 = vmatpush2.msra.mxu0 0.0
    %128 = vmatprep.subr.mxu0 0.0
    %129 = vmatpush2.msra.mxu0 0.0
    %130 = vmatprep.subr.mxu0 0.0
    %131 = vmatpush2.msra.mxu0 0.0
    %132 = vmatprep.subr.mxu0 0.0
    %133 = vmatpush2.msra.mxu0 0.0
    %134 = vmatprep.subr.mxu0 0.0
    %135 = vmatpush2.msra.mxu0 0.0
    %136 = vmatprep.subr.mxu0 0.0
    %137 = vmatpush2.msra.mxu0 0.0
    %138 = vmatprep.subr.mxu0 0.0
    %139 = vmatpush2.msra.mxu0 0.0
    %140 = vmatprep.subr.mxu0 0.0
    %141 = vmatpush2.msra.mxu0 0.0
    %142 = vmatprep.subr.mxu0 0.0
    %143 = vmatpush2.msra.mxu0 0.0
    %144 = vmatprep.subr.mxu0 0.0
    %145 = vmatpush2.msra.mxu0 0.0
    %146 = vmatprep.subr.mxu0 0.0
    %147 = vmatpush2.msra.mxu0 0.0
    %148 = vmatprep.subr.mxu0 0.0
    %149 = vmatpush2.msra.mxu0 0.0
    %150 = vmatprep.subr.mxu0 0.0
    %151 = vmatpush2.msra.mxu0 0.0
    %152 = vmatprep.subr.mxu0 0.0
    %153 = vmatpush2.msra.mxu0 0.0
    %154 = vmatprep.mubr.f32.mxu0 0.0
    %155 = vmatmul.mubr.f32.gmra.mxu0 %v25
    %v156 = vpop.f32.mrf.mxu0
    %v157 = vadd.f32 0.0, %v156
    %v158 = vpop.f32.mrf.mxu0
    %v159 = vadd.f32 0.0, %v158
    %160 = vdwg.mxu0
    %161 = vmatprep.subr.mxu0 %v89
    %162 = vmatpush1.msra.mxu0 %v88
    %163 = vmatprep.subr.mxu0 %v85
    %164 = vmatpush1.msra.mxu0 %v84
    %165 = vmatprep.subr.mxu0 %v81
    %166 = vmatpush1.msra.mxu0 %v80
    %167 = vmatprep.subr.mxu0 %v77
    %168 = vmatpush1.msra.mxu0 %v76
    %169 = vmatprep.subr.mxu0 %v73
    %170 = vmatpush1.msra.mxu0 %v72
    %171 = vmatprep.subr.mxu0 %v69
    %172 = vmatpush1.msra.mxu0 %v68
    %173 = vmatprep.subr.mxu0 %v65
    %174 = vmatpush1.msra.mxu0 %v64
    %175 = vmatprep.subr.mxu0 %v61
    %176 = vmatpush1.msra.mxu0 %v60
    %177 = vmatprep.subr.mxu0 %v57
    %178 = vmatpush1.msra.mxu0 %v56
    %179 = vmatprep.subr.mxu0 %v53
    %180 = vmatpush1.msra.mxu0 %v52
    %181 = vmatprep.subr.mxu0 %v49
    %182 = vmatpush1.msra.mxu0 %v48
    %183 = vmatprep.subr.mxu0 %v45
    %184 = vmatpush1.msra.mxu0 %v44
    %185 = vmatprep.subr.mxu0 %v41
    %186 = vmatpush1.msra.mxu0 %v40
    %187 = vmatprep.subr.mxu0 %v37
    %188 = vmatpush1.msra.mxu0 %v36
    %189 = vmatprep.subr.mxu0 %v33
    %190 = vmatpush1.msra.mxu0 %v32
    %191 = vmatprep.subr.mxu0 %v29
    %192 = vmatpush1.msra.mxu0 %v28
    %193 = vmatprep.subr.mxu0 0.0
    %194 = vmatpush2.msra.mxu0 0.0
    %195 = vmatprep.subr.mxu0 0.0
    %196 = vmatpush2.msra.mxu0 0.0
    %197 = vmatprep.subr.mxu0 0.0
    %198 = vmatpush2.msra.mxu0 0.0
    %199 = vmatprep.subr.mxu0 0.0
    %200 = vmatpush2.msra.mxu0 0.0
    %201 = vmatprep.subr.mxu0 0.0
    %202 = vmatpush2.msra.mxu0 0.0
    %203 = vmatprep.subr.mxu0 0.0
    %204 = vmatpush2.msra.mxu0 0.0
    %205 = vmatprep.subr.mxu0 0.0
    %206 = vmatpush2.msra.mxu0 0.0
    %207 = vmatprep.subr.mxu0 0.0
    %208 = vmatpush2.msra.mxu0 0.0
    %209 = vmatprep.subr.mxu0 0.0
    %210 = vmatpush2.msra.mxu0 0.0
    %211 = vmatprep.subr.mxu0 0.0
    %212 = vmatpush2.msra.mxu0 0.0
    %213 = vmatprep.subr.mxu0 0.0
    %214 = vmatpush2.msra.mxu0 0.0
    %215 = vmatprep.subr.mxu0 0.0
    %216 = vmatpush2.msra.mxu0 0.0
    %217 = vmatprep.subr.mxu0 0.0
    %218 = vmatpush2.msra.mxu0 0.0
    %219 = vmatprep.subr.mxu0 0.0
    %220 = vmatpush2.msra.mxu0 0.0
    %221 = vmatprep.subr.mxu0 0.0
    %222 = vmatpush2.msra.mxu0 0.0
    %223 = vmatprep.subr.mxu0 0.0
    %224 = vmatpush2.msra.mxu0 0.0
    %225 = vmatprep.mubr.f32.mxu0 0.0
    %226 = vmatmul.mubr.f32.gmra.mxu0 %v25
    %v227 = vpop.f32.mrf.mxu0
    %v228 = vadd.f32 0.0, %v227
    %v229 = vpop.f32.mrf.mxu0
    %v230 = vadd.f32 0.0, %v229
    %231 = vdwg.mxu0
    %v236 = vcombine.low %v157, %v159
    %v237 = vcombine.low %v228, %v230
    %v239 = vunpack.c.l.s4 1983009808
    %v240 = vunpack.c.0.s8 %v239
    %v241 = vlaneseq
    %v242 = vshrl.u32 %v241, 7
    %v243 = vsub.s32 %v240, %v242
    %v244 = vrot.slane %v236, %v243
    %v246 = vunpack.c.l.s4 1983009808
    %v247 = vunpack.c.0.s8 %v246
    %v248 = vlaneseq
    %v249 = vshrl.u32 %v248, 7
    %v250 = vsub.s32 %v247, %v249
    %v251 = vrot.slane %v237, %v250
    %v252 = vcombine.low %v244, %v251
    %v254 = vadd.f32 %v24, %v252
    %v255 = vxor.u32 %v254, 2147483648
    %v256 = vmul.f32 %v255, 1.442695
    %v257 = vpow.pop %v256
    %v258 = vadd.f32 %v257, 1.0
    %v259 = vrcp.pop %v258
    %v260 = vmul.f32 1.0, %v259
    %v262 = vrot.slane %v254, 6
    %v264 = vtanh.pop %v262
    %v265 = vld [vmem:[#allocation3] sm:$0x3]
    %v267 = vrot.slane %v260, 2
    %v269 = vmul.f32 %v267, %v265
    %v270 = vmul.f32 %v260, %v264
    %v271 = vadd.f32 %v269, %v270
    %v272 = vtanh.pop %v271
    %v273 = vrot.slane %v260, 4
    %v275 = vmul.f32 %v273, %v272
    %276 = vst [vmem:[#allocation2] sm:$0x3] %v275
    %277 = vst [vmem:[#allocation3] sm:$0x3] %v271
    %s278 = scalar_lea.vmem %s0, 8
    %v279 = vld [vmem:[%s278] sm:$0xff]
    %v280 = vld [vmem:[#allocation2] sm:$0x3]
    %v281 = vld [vmem:[%s1] sm:$0xff]
    %v282 = vld [vmem:[%s1 + $0x8] sm:$0xff]
    %v283 = vld [vmem:[%s1 + $0x10] sm:$0xff]
    %v284 = vld [vmem:[%s1 + $0x18] sm:$0xff]
    %v285 = vld [vmem:[%s1 + $0x20] sm:$0xff]
    %v286 = vld [vmem:[%s1 + $0x28] sm:$0xff]
    %v287 = vld [vmem:[%s1 + $0x30] sm:$0xff]
    %v288 = vld [vmem:[%s1 + $0x38] sm:$0xff]
    %v289 = vld [vmem:[%s1 + $0x40] sm:$0xff]
    %v290 = vld [vmem:[%s1 + $0x48] sm:$0xff]
    %v291 = vld [vmem:[%s1 + $0x50] sm:$0xff]
    %v292 = vld [vmem:[%s1 + $0x58] sm:$0xff]
    %v293 = vld [vmem:[%s1 + $0x60] sm:$0xff]
    %v294 = vld [vmem:[%s1 + $0x68] sm:$0xff]
    %v295 = vld [vmem:[%s1 + $0x70] sm:$0xff]
    %v296 = vld [vmem:[%s1 + $0x78] sm:$0xff]
    %v297 = vld [vmem:[%s1 + $0x80] sm:$0xff]
    %v298 = vld [vmem:[%s1 + $0x88] sm:$0xff]
    %v299 = vld [vmem:[%s1 + $0x90] sm:$0xff]
    %v300 = vld [vmem:[%s1 + $0x98] sm:$0xff]
    %v301 = vld [vmem:[%s1 + $0xa0] sm:$0xff]
    %v302 = vld [vmem:[%s1 + $0xa8] sm:$0xff]
    %v303 = vld [vmem:[%s1 + $0xb0] sm:$0xff]
    %v304 = vld [vmem:[%s1 + $0xb8] sm:$0xff]
    %v305 = vld [vmem:[%s1 + $0xc0] sm:$0xff]
    %v306 = vld [vmem:[%s1 + $0xc8] sm:$0xff]
    %v307 = vld [vmem:[%s1 + $0xd0] sm:$0xff]
    %v308 = vld [vmem:[%s1 + $0xd8] sm:$0xff]
    %v309 = vld [vmem:[%s1 + $0xe0] sm:$0xff]
    %v310 = vld [vmem:[%s1 + $0xe8] sm:$0xff]
    %v311 = vld [vmem:[%s1 + $0xf0] sm:$0xff]
    %v312 = vld [vmem:[%s1 + $0xf8] sm:$0xff]
    %v313 = vld [vmem:[%s1 + $0x100] sm:$0xff]
    %v314 = vld [vmem:[%s1 + $0x108] sm:$0xff]
    %v315 = vld [vmem:[%s1 + $0x110] sm:$0xff]
    %v316 = vld [vmem:[%s1 + $0x118] sm:$0xff]
    %v317 = vld [vmem:[%s1 + $0x120] sm:$0xff]
    %v318 = vld [vmem:[%s1 + $0x128] sm:$0xff]
    %v319 = vld [vmem:[%s1 + $0x130] sm:$0xff]
    %v320 = vld [vmem:[%s1 + $0x138] sm:$0xff]
    %v321 = vld [vmem:[%s1 + $0x140] sm:$0xff]
    %v322 = vld [vmem:[%s1 + $0x148] sm:$0xff]
    %v323 = vld [vmem:[%s1 + $0x150] sm:$0xff]
    %v324 = vld [vmem:[%s1 + $0x158] sm:$0xff]
    %v325 = vld [vmem:[%s1 + $0x160] sm:$0xff]
    %v326 = vld [vmem:[%s1 + $0x168] sm:$0xff]
    %v327 = vld [vmem:[%s1 + $0x170] sm:$0xff]
    %v328 = vld [vmem:[%s1 + $0x178] sm:$0xff]
    %v329 = vld [vmem:[%s1 + $0x180] sm:$0xff]
    %v330 = vld [vmem:[%s1 + $0x188] sm:$0xff]
    %v331 = vld [vmem:[%s1 + $0x190] sm:$0xff]
    %v332 = vld [vmem:[%s1 + $0x198] sm:$0xff]
    %v333 = vld [vmem:[%s1 + $0x1a0] sm:$0xff]
    %v334 = vld [vmem:[%s1 + $0x1a8] sm:$0xff]
    %v335 = vld [vmem:[%s1 + $0x1b0] sm:$0xff]
    %v336 = vld [vmem:[%s1 + $0x1b8] sm:$0xff]
    %v337 = vld [vmem:[%s1 + $0x1c0] sm:$0xff]
    %v338 = vld [vmem:[%s1 + $0x1c8] sm:$0xff]
    %v339 = vld [vmem:[%s1 + $0x1d0] sm:$0xff]
    %v340 = vld [vmem:[%s1 + $0x1d8] sm:$0xff]
    %v341 = vld [vmem:[%s1 + $0x1e0] sm:$0xff]
    %v342 = vld [vmem:[%s1 + $0x1e8] sm:$0xff]
    %v343 = vld [vmem:[%s1 + $0x1f0] sm:$0xff]
    %v344 = vld [vmem:[%s1 + $0x1f8] sm:$0xff]
    %345 = vmatprep.subr.mxu0 %v342
    %346 = vmatpush1.msra.mxu0 %v341
    %347 = vmatprep.subr.mxu0 %v338
    %348 = vmatpush1.msra.mxu0 %v337
    %349 = vmatprep.subr.mxu0 %v334
    %350 = vmatpush1.msra.mxu0 %v333
    %351 = vmatprep.subr.mxu0 %v330
    %352 = vmatpush1.msra.mxu0 %v329
    %353 = vmatprep.subr.mxu0 %v326
    %354 = vmatpush1.msra.mxu0 %v325
    %355 = vmatprep.subr.mxu0 %v322
    %356 = vmatpush1.msra.mxu0 %v321
    %357 = vmatprep.subr.mxu0 %v318
    %358 = vmatpush1.msra.mxu0 %v317
    %359 = vmatprep.subr.mxu0 %v314
    %360 = vmatpush1.msra.mxu0 %v313
    %361 = vmatprep.subr.mxu0 %v310
    %362 = vmatpush1.msra.mxu0 %v309
    %363 = vmatprep.subr.mxu0 %v306
    %364 = vmatpush1.msra.mxu0 %v305
    %365 = vmatprep.subr.mxu0 %v302
    %366 = vmatpush1.msra.mxu0 %v301
    %367 = vmatprep.subr.mxu0 %v298
    %368 = vmatpush1.msra.mxu0 %v297
    %369 = vmatprep.subr.mxu0 %v294
    %370 = vmatpush1.msra.mxu0 %v293
    %371 = vmatprep.subr.mxu0 %v290
    %372 = vmatpush1.msra.mxu0 %v289
    %373 = vmatprep.subr.mxu0 %v286
    %374 = vmatpush1.msra.mxu0 %v285
    %375 = vmatprep.subr.mxu0 %v282
    %376 = vmatpush1.msra.mxu0 %v281
    %377 = vmatprep.subr.mxu0 0.0
    %378 = vmatpush2.msra.mxu0 0.0
    %379 = vmatprep.subr.mxu0 0.0
    %380 = vmatpush2.msra.mxu0 0.0
    %381 = vmatprep.subr.mxu0 0.0
    %382 = vmatpush2.msra.mxu0 0.0
    %383 = vmatprep.subr.mxu0 0.0
    %384 = vmatpush2.msra.mxu0 0.0
    %385 = vmatprep.subr.mxu0 0.0
    %386 = vmatpush2.msra.mxu0 0.0
    %387 = vmatprep.subr.mxu0 0.0
    %388 = vmatpush2.msra.mxu0 0.0
    %389 = vmatprep.subr.mxu0 0.0
    %390 = vmatpush2.msra.mxu0 0.0
    %391 = vmatprep.subr.mxu0 0.0
    %392 = vmatpush2.msra.mxu0 0.0
    %393 = vmatprep.subr.mxu0 0.0
    %394 = vmatpush2.msra.mxu0 0.0
    %395 = vmatprep.subr.mxu0 0.0
    %396 = vmatpush2.msra.mxu0 0.0
    %397 = vmatprep.subr.mxu0 0.0
    %398 = vmatpush2.msra.mxu0 0.0
    %399 = vmatprep.subr.mxu0 0.0
    %400 = vmatpush2.msra.mxu0 0.0
    %401 = vmatprep.subr.mxu0 0.0
    %402 = vmatpush2.msra.mxu0 0.0
    %403 = vmatprep.subr.mxu0 0.0
    %404 = vmatpush2.msra.mxu0 0.0
    %405 = vmatprep.subr.mxu0 0.0
    %406 = vmatpush2.msra.mxu0 0.0
    %407 = vmatprep.subr.mxu0 0.0
    %408 = vmatpush2.msra.mxu0 0.0
    %409 = vmatprep.mubr.f32.mxu0 0.0
    %410 = vmatmul.mubr.f32.gmra.mxu0 %v280
    %v411 = vpop.f32.mrf.mxu0
    %v412 = vadd.f32 0.0, %v411
    %v413 = vpop.f32.mrf.mxu0
    %v414 = vadd.f32 0.0, %v413
    %415 = vdwg.mxu0
    %416 = vmatprep.subr.mxu0 %v344
    %417 = vmatpush1.msra.mxu0 %v343
    %418 = vmatprep.subr.mxu0 %v340
    %419 = vmatpush1.msra.mxu0 %v339
    %420 = vmatprep.subr.mxu0 %v336
    %421 = vmatpush1.msra.mxu0 %v335
    %422 = vmatprep.subr.mxu0 %v332
    %423 = vmatpush1.msra.mxu0 %v331
    %424 = vmatprep.subr.mxu0 %v328
    %425 = vmatpush1.msra.mxu0 %v327
    %426 = vmatprep.subr.mxu0 %v324
    %427 = vmatpush1.msra.mxu0 %v323
    %428 = vmatprep.subr.mxu0 %v320
    %429 = vmatpush1.msra.mxu0 %v319
    %430 = vmatprep.subr.mxu0 %v316
    %431 = vmatpush1.msra.mxu0 %v315
    %432 = vmatprep.subr.mxu0 %v312
    %433 = vmatpush1.msra.mxu0 %v311
    %434 = vmatprep.subr.mxu0 %v308
    %435 = vmatpush1.msra.mxu0 %v307
    %436 = vmatprep.subr.mxu0 %v304
    %437 = vmatpush1.msra.mxu0 %v303
    %438 = vmatprep.subr.mxu0 %v300
    %439 = vmatpush1.msra.mxu0 %v299
    %440 = vmatprep.subr.mxu0 %v296
    %441 = vmatpush1.msra.mxu0 %v295
    %442 = vmatprep.subr.mxu0 %v292
    %443 = vmatpush1.msra.mxu0 %v291
    %444 = vmatprep.subr.mxu0 %v288
    %445 = vmatpush1.msra.mxu0 %v287
    %446 = vmatprep.subr.mxu0 %v284
    %447 = vmatpush1.msra.mxu0 %v283
    %448 = vmatprep.subr.mxu0 0.0
    %449 = vmatpush2.msra.mxu0 0.0
    %450 = vmatprep.subr.mxu0 0.0
    %451 = vmatpush2.msra.mxu0 0.0
    %452 = vmatprep.subr.mxu0 0.0
    %453 = vmatpush2.msra.mxu0 0.0
    %454 = vmatprep.subr.mxu0 0.0
    %455 = vmatpush2.msra.mxu0 0.0
    %456 = vmatprep.subr.mxu0 0.0
    %457 = vmatpush2.msra.mxu0 0.0
    %458 = vmatprep.subr.mxu0 0.0
    %459 = vmatpush2.msra.mxu0 0.0
    %460 = vmatprep.subr.mxu0 0.0
    %461 = vmatpush2.msra.mxu0 0.0
    %462 = vmatprep.subr.mxu0 0.0
    %463 = vmatpush2.msra.mxu0 0.0
    %464 = vmatprep.subr.mxu0 0.0
    %465 = vmatpush2.msra.mxu0 0.0
    %466 = vmatprep.subr.mxu0 0.0
    %467 = vmatpush2.msra.mxu0 0.0
    %468 = vmatprep.subr.mxu0 0.0
    %469 = vmatpush2.msra.mxu0 0.0
    %470 = vmatprep.subr.mxu0 0.0
    %471 = vmatpush2.msra.mxu0 0.0
    %472 = vmatprep.subr.mxu0 0.0
    %473 = vmatpush2.msra.mxu0 0.0
    %474 = vmatprep.subr.mxu0 0.0
    %475 = vmatpush2.msra.mxu0 0.0
    %476 = vmatprep.subr.mxu0 0.0
    %477 = vmatpush2.msra.mxu0 0.0
    %478 = vmatprep.subr.mxu0 0.0
    %479 = vmatpush2.msra.mxu0 0.0
    %480 = vmatprep.mubr.f32.mxu0 0.0
    %481 = vmatmul.mubr.f32.gmra.mxu0 %v280
    %v482 = vpop.f32.mrf.mxu0
    %v483 = vadd.f32 0.0, %v482
    %v484 = vpop.f32.mrf.mxu0
    %v485 = vadd.f32 0.0, %v484
    %486 = vdwg.mxu0
    %v491 = vcombine.low %v412, %v414
    %v492 = vcombine.low %v483, %v485
    %v494 = vunpack.c.l.s4 1983009808
    %v495 = vunpack.c.0.s8 %v494
    %v496 = vlaneseq
    %v497 = vshrl.u32 %v496, 7
    %v498 = vsub.s32 %v495, %v497
    %v499 = vrot.slane %v491, %v498
    %v501 = vunpack.c.l.s4 1983009808
    %v502 = vunpack.c.0.s8 %v501
    %v503 = vlaneseq
    %v504 = vshrl.u32 %v503, 7
    %v505 = vsub.s32 %v502, %v504
    %v506 = vrot.slane %v492, %v505
    %v507 = vcombine.low %v499, %v506
    %v509 = vadd.f32 %v279, %v507
    %v510 = vxor.u32 %v509, 2147483648
    %v511 = vmul.f32 %v510, 1.442695
    %v512 = vpow.pop %v511
    %v513 = vadd.f32 %v512, 1.0
    %v514 = vrcp.pop %v513
    %v515 = vmul.f32 1.0, %v514
    %v517 = vrot.slane %v509, 6
    %v519 = vtanh.pop %v517
    %v520 = vld [vmem:[#allocation3] sm:$0x3]
    %v522 = vrot.slane %v515, 2
    %v524 = vmul.f32 %v522, %v520
    %v525 = vmul.f32 %v515, %v519
    %v526 = vadd.f32 %v524, %v525
    %v527 = vtanh.pop %v526
    %v528 = vrot.slane %v515, 4
    %v530 = vmul.f32 %v528, %v527
    %531 = vst [vmem:[#allocation2] sm:$0x3] %v530
    %532 = vst [vmem:[#allocation3] sm:$0x3] %v526
    %s533 = scalar_lea.vmem %s0, 16
    %v534 = vld [vmem:[%s533] sm:$0xff]
    %v535 = vld [vmem:[#allocation2] sm:$0x3]
    %v536 = vld [vmem:[%s1] sm:$0xff]
    %v537 = vld [vmem:[%s1 + $0x8] sm:$0xff]
    %v538 = vld [vmem:[%s1 + $0x10] sm:$0xff]
    %v539 = vld [vmem:[%s1 + $0x18] sm:$0xff]
    %v540 = vld [vmem:[%s1 + $0x20] sm:$0xff]
    %v541 = vld [vmem:[%s1 + $0x28] sm:$0xff]
    %v542 = vld [vmem:[%s1 + $0x30] sm:$0xff]
    %v543 = vld [vmem:[%s1 + $0x38] sm:$0xff]
    %v544 = vld [vmem:[%s1 + $0x40] sm:$0xff]
    %v545 = vld [vmem:[%s1 + $0x48] sm:$0xff]
    %v546 = vld [vmem:[%s1 + $0x50] sm:$0xff]
    %v547 = vld [vmem:[%s1 + $0x58] sm:$0xff]
    %v548 = vld [vmem:[%s1 + $0x60] sm:$0xff]
    %v549 = vld [vmem:[%s1 + $0x68] sm:$0xff]
    %v550 = vld [vmem:[%s1 + $0x70] sm:$0xff]
    %v551 = vld [vmem:[%s1 + $0x78] sm:$0xff]
    %v552 = vld [vmem:[%s1 + $0x80] sm:$0xff]
    %v553 = vld [vmem:[%s1 + $0x88] sm:$0xff]
    %v554 = vld [vmem:[%s1 + $0x90] sm:$0xff]
    %v555 = vld [vmem:[%s1 + $0x98] sm:$0xff]
    %v556 = vld [vmem:[%s1 + $0xa0] sm:$0xff]
    %v557 = vld [vmem:[%s1 + $0xa8] sm:$0xff]
    %v558 = vld [vmem:[%s1 + $0xb0] sm:$0xff]
    %v559 = vld [vmem:[%s1 + $0xb8] sm:$0xff]
    %v560 = vld [vmem:[%s1 + $0xc0] sm:$0xff]
    %v561 = vld [vmem:[%s1 + $0xc8] sm:$0xff]
    %v562 = vld [vmem:[%s1 + $0xd0] sm:$0xff]
    %v563 = vld [vmem:[%s1 + $0xd8] sm:$0xff]
    %v564 = vld [vmem:[%s1 + $0xe0] sm:$0xff]
    %v565 = vld [vmem:[%s1 + $0xe8] sm:$0xff]
    %v566 = vld [vmem:[%s1 + $0xf0] sm:$0xff]
    %v567 = vld [vmem:[%s1 + $0xf8] sm:$0xff]
    %v568 = vld [vmem:[%s1 + $0x100] sm:$0xff]
    %v569 = vld [vmem:[%s1 + $0x108] sm:$0xff]
    %v570 = vld [vmem:[%s1 + $0x110] sm:$0xff]
    %v571 = vld [vmem:[%s1 + $0x118] sm:$0xff]
    %v572 = vld [vmem:[%s1 + $0x120] sm:$0xff]
    %v573 = vld [vmem:[%s1 + $0x128] sm:$0xff]
    %v574 = vld [vmem:[%s1 + $0x130] sm:$0xff]
    %v575 = vld [vmem:[%s1 + $0x138] sm:$0xff]
    %v576 = vld [vmem:[%s1 + $0x140] sm:$0xff]
    %v577 = vld [vmem:[%s1 + $0x148] sm:$0xff]
    %v578 = vld [vmem:[%s1 + $0x150] sm:$0xff]
    %v579 = vld [vmem:[%s1 + $0x158] sm:$0xff]
    %v580 = vld [vmem:[%s1 + $0x160] sm:$0xff]
    %v581 = vld [vmem:[%s1 + $0x168] sm:$0xff]
    %v582 = vld [vmem:[%s1 + $0x170] sm:$0xff]
    %v583 = vld [vmem:[%s1 + $0x178] sm:$0xff]
    %v584 = vld [vmem:[%s1 + $0x180] sm:$0xff]
    %v585 = vld [vmem:[%s1 + $0x188] sm:$0xff]
    %v586 = vld [vmem:[%s1 + $0x190] sm:$0xff]
    %v587 = vld [vmem:[%s1 + $0x198] sm:$0xff]
    %v588 = vld [vmem:[%s1 + $0x1a0] sm:$0xff]
    %v589 = vld [vmem:[%s1 + $0x1a8] sm:$0xff]
    %v590 = vld [vmem:[%s1 + $0x1b0] sm:$0xff]
    %v591 = vld [vmem:[%s1 + $0x1b8] sm:$0xff]
    %v592 = vld [vmem:[%s1 + $0x1c0] sm:$0xff]
    %v593 = vld [vmem:[%s1 + $0x1c8] sm:$0xff]
    %v594 = vld [vmem:[%s1 + $0x1d0] sm:$0xff]
    %v595 = vld [vmem:[%s1 + $0x1d8] sm:$0xff]
    %v596 = vld [vmem:[%s1 + $0x1e0] sm:$0xff]
    %v597 = vld [vmem:[%s1 + $0x1e8] sm:$0xff]
    %v598 = vld [vmem:[%s1 + $0x1f0] sm:$0xff]
    %v599 = vld [vmem:[%s1 + $0x1f8] sm:$0xff]
    %600 = vmatprep.subr.mxu0 %v597
    %601 = vmatpush1.msra.mxu0 %v596
    %602 = vmatprep.subr.mxu0 %v593
    %603 = vmatpush1.msra.mxu0 %v592
    %604 = vmatprep.subr.mxu0 %v589
    %605 = vmatpush1.msra.mxu0 %v588
    %606 = vmatprep.subr.mxu0 %v585
    %607 = vmatpush1.msra.mxu0 %v584
    %608 = vmatprep.subr.mxu0 %v581
    %609 = vmatpush1.msra.mxu0 %v580
    %610 = vmatprep.subr.mxu0 %v577
    %611 = vmatpush1.msra.mxu0 %v576
    %612 = vmatprep.subr.mxu0 %v573
    %613 = vmatpush1.msra.mxu0 %v572
    %614 = vmatprep.subr.mxu0 %v569
    %615 = vmatpush1.msra.mxu0 %v568
    %616 = vmatprep.subr.mxu0 %v565
    %617 = vmatpush1.msra.mxu0 %v564
    %618 = vmatprep.subr.mxu0 %v561
    %619 = vmatpush1.msra.mxu0 %v560
    %620 = vmatprep.subr.mxu0 %v557
    %621 = vmatpush1.msra.mxu0 %v556
    %622 = vmatprep.subr.mxu0 %v553
    %623 = vmatpush1.msra.mxu0 %v552
    %624 = vmatprep.subr.mxu0 %v549
    %625 = vmatpush1.msra.mxu0 %v548
    %626 = vmatprep.subr.mxu0 %v545
    %627 = vmatpush1.msra.mxu0 %v544
    %628 = vmatprep.subr.mxu0 %v541
    %629 = vmatpush1.msra.mxu0 %v540
    %630 = vmatprep.subr.mxu0 %v537
    %631 = vmatpush1.msra.mxu0 %v536
    %632 = vmatprep.subr.mxu0 0.0
    %633 = vmatpush2.msra.mxu0 0.0
    %634 = vmatprep.subr.mxu0 0.0
    %635 = vmatpush2.msra.mxu0 0.0
    %636 = vmatprep.subr.mxu0 0.0
    %637 = vmatpush2.msra.mxu0 0.0
    %638 = vmatprep.subr.mxu0 0.0
    %639 = vmatpush2.msra.mxu0 0.0
    %640 = vmatprep.subr.mxu0 0.0
    %641 = vmatpush2.msra.mxu0 0.0
    %642 = vmatprep.subr.mxu0 0.0
    %643 = vmatpush2.msra.mxu0 0.0
    %644 = vmatprep.subr.mxu0 0.0
    %645 = vmatpush2.msra.mxu0 0.0
    %646 = vmatprep.subr.mxu0 0.0
    %647 = vmatpush2.msra.mxu0 0.0
    %648 = vmatprep.subr.mxu0 0.0
    %649 = vmatpush2.msra.mxu0 0.0
    %650 = vmatprep.subr.mxu0 0.0
    %651 = vmatpush2.msra.mxu0 0.0
    %652 = vmatprep.subr.mxu0 0.0
    %653 = vmatpush2.msra.mxu0 0.0
    %654 = vmatprep.subr.mxu0 0.0
    %655 = vmatpush2.msra.mxu0 0.0
    %656 = vmatprep.subr.mxu0 0.0
    %657 = vmatpush2.msra.mxu0 0.0
    %658 = vmatprep.subr.mxu0 0.0
    %659 = vmatpush2.msra.mxu0 0.0
    %660 = vmatprep.subr.mxu0 0.0
    %661 = vmatpush2.msra.mxu0 0.0
    %662 = vmatprep.subr.mxu0 0.0
    %663 = vmatpush2.msra.mxu0 0.0
    %664 = vmatprep.mubr.f32.mxu0 0.0
    %665 = vmatmul.mubr.f32.gmra.mxu0 %v535
    %v666 = vpop.f32.mrf.mxu0
    %v667 = vadd.f32 0.0, %v666
    %v668 = vpop.f32.mrf.mxu0
    %v669 = vadd.f32 0.0, %v668
    %670 = vdwg.mxu0
    %671 = vmatprep.subr.mxu0 %v599
    %672 = vmatpush1.msra.mxu0 %v598
    %673 = vmatprep.subr.mxu0 %v595
    %674 = vmatpush1.msra.mxu0 %v594
    %675 = vmatprep.subr.mxu0 %v591
    %676 = vmatpush1.msra.mxu0 %v590
    %677 = vmatprep.subr.mxu0 %v587
    %678 = vmatpush1.msra.mxu0 %v586
    %679 = vmatprep.subr.mxu0 %v583
    %680 = vmatpush1.msra.mxu0 %v582
    %681 = vmatprep.subr.mxu0 %v579
    %682 = vmatpush1.msra.mxu0 %v578
    %683 = vmatprep.subr.mxu0 %v575
    %684 = vmatpush1.msra.mxu0 %v574
    %685 = vmatprep.subr.mxu0 %v571
    %686 = vmatpush1.msra.mxu0 %v570
    %687 = vmatprep.subr.mxu0 %v567
    %688 = vmatpush1.msra.mxu0 %v566
    %689 = vmatprep.subr.mxu0 %v563
    %690 = vmatpush1.msra.mxu0 %v562
    %691 = vmatprep.subr.mxu0 %v559
    %692 = vmatpush1.msra.mxu0 %v558
    %693 = vmatprep.subr.mxu0 %v555
    %694 = vmatpush1.msra.mxu0 %v554
    %695 = vmatprep.subr.mxu0 %v551
    %696 = vmatpush1.msra.mxu0 %v550
    %697 = vmatprep.subr.mxu0 %v547
    %698 = vmatpush1.msra.mxu0 %v546
    %699 = vmatprep.subr.mxu0 %v543
    %700 = vmatpush1.msra.mxu0 %v542
    %701 = vmatprep.subr.mxu0 %v539
    %702 = vmatpush1.msra.mxu0 %v538
    %703 = vmatprep.subr.mxu0 0.0
    %704 = vmatpush2.msra.mxu0 0.0
    %705 = vmatprep.subr.mxu0 0.0
    %706 = vmatpush2.msra.mxu0 0.0
    %707 = vmatprep.subr.mxu0 0.0
    %708 = vmatpush2.msra.mxu0 0.0
    %709 = vmatprep.subr.mxu0 0.0
    %710 = vmatpush2.msra.mxu0 0.0
    %711 = vmatprep.subr.mxu0 0.0
    %712 = vmatpush2.msra.mxu0 0.0
    %713 = vmatprep.subr.mxu0 0.0
    %714 = vmatpush2.msra.mxu0 0.0
    %715 = vmatprep.subr.mxu0 0.0
    %716 = vmatpush2.msra.mxu0 0.0
    %717 = vmatprep.subr.mxu0 0.0
    %718 = vmatpush2.msra.mxu0 0.0
    %719 = vmatprep.subr.mxu0 0.0
    %720 = vmatpush2.msra.mxu0 0.0
    %721 = vmatprep.subr.mxu0 0.0
    %722 = vmatpush2.msra.mxu0 0.0
    %723 = vmatprep.subr.mxu0 0.0
    %724 = vmatpush2.msra.mxu0 0.0
    %725 = vmatprep.subr.mxu0 0.0
    %726 = vmatpush2.msra.mxu0 0.0
    %727 = vmatprep.subr.mxu0 0.0
    %728 = vmatpush2.msra.mxu0 0.0
    %729 = vmatprep.subr.mxu0 0.0
    %730 = vmatpush2.msra.mxu0 0.0
    %731 = vmatprep.subr.mxu0 0.0
    %732 = vmatpush2.msra.mxu0 0.0
    %733 = vmatprep.subr.mxu0 0.0
    %734 = vmatpush2.msra.mxu0 0.0
    %735 = vmatprep.mubr.f32.mxu0 0.0
    %736 = vmatmul.mubr.f32.gmra.mxu0 %v535
    %v737 = vpop.f32.mrf.mxu0
    %v738 = vadd.f32 0.0, %v737
    %v739 = vpop.f32.mrf.mxu0
    %v740 = vadd.f32 0.0, %v739
    %741 = vdwg.mxu0
    %v746 = vcombine.low %v667, %v669
    %v747 = vcombine.low %v738, %v740
    %v749 = vunpack.c.l.s4 1983009808
    %v750 = vunpack.c.0.s8 %v749
    %v751 = vlaneseq
    %v752 = vshrl.u32 %v751, 7
    %v753 = vsub.s32 %v750, %v752
    %v754 = vrot.slane %v746, %v753
    %v756 = vunpack.c.l.s4 1983009808
    %v757 = vunpack.c.0.s8 %v756
    %v758 = vlaneseq
    %v759 = vshrl.u32 %v758, 7
    %v760 = vsub.s32 %v757, %v759
    %v761 = vrot.slane %v747, %v760
    %v762 = vcombine.low %v754, %v761
    %v764 = vadd.f32 %v534, %v762
    %v765 = vxor.u32 %v764, 2147483648
    %v766 = vmul.f32 %v765, 1.442695
    %v767 = vpow.pop %v766
    %v768 = vadd.f32 %v767, 1.0
    %v769 = vrcp.pop %v768
    %v770 = vmul.f32 1.0, %v769
    %v772 = vrot.slane %v764, 6
    %v774 = vtanh.pop %v772
    %v775 = vld [vmem:[#allocation3] sm:$0x3]
    %v777 = vrot.slane %v770, 2
    %v779 = vmul.f32 %v777, %v775
    %v780 = vmul.f32 %v770, %v774
    %v781 = vadd.f32 %v779, %v780
    %v782 = vtanh.pop %v781
    %v783 = vrot.slane %v770, 4
    %v785 = vmul.f32 %v783, %v782
    %786 = vst [vmem:[#allocation2] sm:$0x3] %v785
    %787 = vst [vmem:[#allocation3] sm:$0x3] %v781
    %s788 = scalar_lea.vmem %s0, 24
    %v789 = vld [vmem:[%s788] sm:$0xff]
    %v790 = vld [vmem:[#allocation2] sm:$0x3]
    %v791 = vld [vmem:[%s1] sm:$0xff]
    %v792 = vld [vmem:[%s1 + $0x8] sm:$0xff]
    %v793 = vld [vmem:[%s1 + $0x10] sm:$0xff]
    %v794 = vld [vmem:[%s1 + $0x18] sm:$0xff]
    %v795 = vld [vmem:[%s1 + $0x20] sm:$0xff]
    %v796 = vld [vmem:[%s1 + $0x28] sm:$0xff]
    %v797 = vld [vmem:[%s1 + $0x30] sm:$0xff]
    %v798 = vld [vmem:[%s1 + $0x38] sm:$0xff]
    %v799 = vld [vmem:[%s1 + $0x40] sm:$0xff]
    %v800 = vld [vmem:[%s1 + $0x48] sm:$0xff]
    %v801 = vld [vmem:[%s1 + $0x50] sm:$0xff]
    %v802 = vld [vmem:[%s1 + $0x58] sm:$0xff]
    %v803 = vld [vmem:[%s1 + $0x60] sm:$0xff]
    %v804 = vld [vmem:[%s1 + $0x68] sm:$0xff]
    %v805 = vld [vmem:[%s1 + $0x70] sm:$0xff]
    %v806 = vld [vmem:[%s1 + $0x78] sm:$0xff]
    %v807 = vld [vmem:[%s1 + $0x80] sm:$0xff]
    %v808 = vld [vmem:[%s1 + $0x88] sm:$0xff]
    %v809 = vld [vmem:[%s1 + $0x90] sm:$0xff]
    %v810 = vld [vmem:[%s1 + $0x98] sm:$0xff]
    %v811 = vld [vmem:[%s1 + $0xa0] sm:$0xff]
    %v812 = vld [vmem:[%s1 + $0xa8] sm:$0xff]
    %v813 = vld [vmem:[%s1 + $0xb0] sm:$0xff]
    %v814 = vld [vmem:[%s1 + $0xb8] sm:$0xff]
    %v815 = vld [vmem:[%s1 + $0xc0] sm:$0xff]
    %v816 = vld [vmem:[%s1 + $0xc8] sm:$0xff]
    %v817 = vld [vmem:[%s1 + $0xd0] sm:$0xff]
    %v818 = vld [vmem:[%s1 + $0xd8] sm:$0xff]
    %v819 = vld [vmem:[%s1 + $0xe0] sm:$0xff]
    %v820 = vld [vmem:[%s1 + $0xe8] sm:$0xff]
    %v821 = vld [vmem:[%s1 + $0xf0] sm:$0xff]
    %v822 = vld [vmem:[%s1 + $0xf8] sm:$0xff]
    %v823 = vld [vmem:[%s1 + $0x100] sm:$0xff]
    %v824 = vld [vmem:[%s1 + $0x108] sm:$0xff]
    %v825 = vld [vmem:[%s1 + $0x110] sm:$0xff]
    %v826 = vld [vmem:[%s1 + $0x118] sm:$0xff]
    %v827 = vld [vmem:[%s1 + $0x120] sm:$0xff]
    %v828 = vld [vmem:[%s1 + $0x128] sm:$0xff]
    %v829 = vld [vmem:[%s1 + $0x130] sm:$0xff]
    %v830 = vld [vmem:[%s1 + $0x138] sm:$0xff]
    %v831 = vld [vmem:[%s1 + $0x140] sm:$0xff]
    %v832 = vld [vmem:[%s1 + $0x148] sm:$0xff]
    %v833 = vld [vmem:[%s1 + $0x150] sm:$0xff]
    %v834 = vld [vmem:[%s1 + $0x158] sm:$0xff]
    %v835 = vld [vmem:[%s1 + $0x160] sm:$0xff]
    %v836 = vld [vmem:[%s1 + $0x168] sm:$0xff]
    %v837 = vld [vmem:[%s1 + $0x170] sm:$0xff]
    %v838 = vld [vmem:[%s1 + $0x178] sm:$0xff]
    %v839 = vld [vmem:[%s1 + $0x180] sm:$0xff]
    %v840 = vld [vmem:[%s1 + $0x188] sm:$0xff]
    %v841 = vld [vmem:[%s1 + $0x190] sm:$0xff]
    %v842 = vld [vmem:[%s1 + $0x198] sm:$0xff]
    %v843 = vld [vmem:[%s1 + $0x1a0] sm:$0xff]
    %v844 = vld [vmem:[%s1 + $0x1a8] sm:$0xff]
    %v845 = vld [vmem:[%s1 + $0x1b0] sm:$0xff]
    %v846 = vld [vmem:[%s1 + $0x1b8] sm:$0xff]
    %v847 = vld [vmem:[%s1 + $0x1c0] sm:$0xff]
    %v848 = vld [vmem:[%s1 + $0x1c8] sm:$0xff]
    %v849 = vld [vmem:[%s1 + $0x1d0] sm:$0xff]
    %v850 = vld [vmem:[%s1 + $0x1d8] sm:$0xff]
    %v851 = vld [vmem:[%s1 + $0x1e0] sm:$0xff]
    %v852 = vld [vmem:[%s1 + $0x1e8] sm:$0xff]
    %v853 = vld [vmem:[%s1 + $0x1f0] sm:$0xff]
    %v854 = vld [vmem:[%s1 + $0x1f8] sm:$0xff]
    %855 = vmatprep.subr.mxu0 %v852
    %856 = vmatpush1.msra.mxu0 %v851
    %857 = vmatprep.subr.mxu0 %v848
    %858 = vmatpush1.msra.mxu0 %v847
    %859 = vmatprep.subr.mxu0 %v844
    %860 = vmatpush1.msra.mxu0 %v843
    %861 = vmatprep.subr.mxu0 %v840
    %862 = vmatpush1.msra.mxu0 %v839
    %863 = vmatprep.subr.mxu0 %v836
    %864 = vmatpush1.msra.mxu0 %v835
    %865 = vmatprep.subr.mxu0 %v832
    %866 = vmatpush1.msra.mxu0 %v831
    %867 = vmatprep.subr.mxu0 %v828
    %868 = vmatpush1.msra.mxu0 %v827
    %869 = vmatprep.subr.mxu0 %v824
    %870 = vmatpush1.msra.mxu0 %v823
    %871 = vmatprep.subr.mxu0 %v820
    %872 = vmatpush1.msra.mxu0 %v819
    %873 = vmatprep.subr.mxu0 %v816
    %874 = vmatpush1.msra.mxu0 %v815
    %875 = vmatprep.subr.mxu0 %v812
    %876 = vmatpush1.msra.mxu0 %v811
    %877 = vmatprep.subr.mxu0 %v808
    %878 = vmatpush1.msra.mxu0 %v807
    %879 = vmatprep.subr.mxu0 %v804
    %880 = vmatpush1.msra.mxu0 %v803
    %881 = vmatprep.subr.mxu0 %v800
    %882 = vmatpush1.msra.mxu0 %v799
    %883 = vmatprep.subr.mxu0 %v796
    %884 = vmatpush1.msra.mxu0 %v795
    %885 = vmatprep.subr.mxu0 %v792
    %886 = vmatpush1.msra.mxu0 %v791
    %887 = vmatprep.subr.mxu0 0.0
    %888 = vmatpush2.msra.mxu0 0.0
    %889 = vmatprep.subr.mxu0 0.0
    %890 = vmatpush2.msra.mxu0 0.0
    %891 = vmatprep.subr.mxu0 0.0
    %892 = vmatpush2.msra.mxu0 0.0
    %893 = vmatprep.subr.mxu0 0.0
    %894 = vmatpush2.msra.mxu0 0.0
    %895 = vmatprep.subr.mxu0 0.0
    %896 = vmatpush2.msra.mxu0 0.0
    %897 = vmatprep.subr.mxu0 0.0
    %898 = vmatpush2.msra.mxu0 0.0
    %899 = vmatprep.subr.mxu0 0.0
    %900 = vmatpush2.msra.mxu0 0.0
    %901 = vmatprep.subr.mxu0 0.0
    %902 = vmatpush2.msra.mxu0 0.0
    %903 = vmatprep.subr.mxu0 0.0
    %904 = vmatpush2.msra.mxu0 0.0
    %905 = vmatprep.subr.mxu0 0.0
    %906 = vmatpush2.msra.mxu0 0.0
    %907 = vmatprep.subr.mxu0 0.0
    %908 = vmatpush2.msra.mxu0 0.0
    %909 = vmatprep.subr.mxu0 0.0
    %910 = vmatpush2.msra.mxu0 0.0
    %911 = vmatprep.subr.mxu0 0.0
    %912 = vmatpush2.msra.mxu0 0.0
    %913 = vmatprep.subr.mxu0 0.0
    %914 = vmatpush2.msra.mxu0 0.0
    %915 = vmatprep.subr.mxu0 0.0
    %916 = vmatpush2.msra.mxu0 0.0
    %917 = vmatprep.subr.mxu0 0.0
    %918 = vmatpush2.msra.mxu0 0.0
    %919 = vmatprep.mubr.f32.mxu0 0.0
    %920 = vmatmul.mubr.f32.gmra.mxu0 %v790
    %v921 = vpop.f32.mrf.mxu0
    %v922 = vadd.f32 0.0, %v921
    %v923 = vpop.f32.mrf.mxu0
    %v924 = vadd.f32 0.0, %v923
    %925 = vdwg.mxu0
    %926 = vmatprep.subr.mxu0 %v854
    %927 = vmatpush1.msra.mxu0 %v853
    %928 = vmatprep.subr.mxu0 %v850
    %929 = vmatpush1.msra.mxu0 %v849
    %930 = vmatprep.subr.mxu0 %v846
    %931 = vmatpush1.msra.mxu0 %v845
    %932 = vmatprep.subr.mxu0 %v842
    %933 = vmatpush1.msra.mxu0 %v841
    %934 = vmatprep.subr.mxu0 %v838
    %935 = vmatpush1.msra.mxu0 %v837
    %936 = vmatprep.subr.mxu0 %v834
    %937 = vmatpush1.msra.mxu0 %v833
    %938 = vmatprep.subr.mxu0 %v830
    %939 = vmatpush1.msra.mxu0 %v829
    %940 = vmatprep.subr.mxu0 %v826
    %941 = vmatpush1.msra.mxu0 %v825
    %942 = vmatprep.subr.mxu0 %v822
    %943 = vmatpush1.msra.mxu0 %v821
    %944 = vmatprep.subr.mxu0 %v818
    %945 = vmatpush1.msra.mxu0 %v817
    %946 = vmatprep.subr.mxu0 %v814
    %947 = vmatpush1.msra.mxu0 %v813
    %948 = vmatprep.subr.mxu0 %v810
    %949 = vmatpush1.msra.mxu0 %v809
    %950 = vmatprep.subr.mxu0 %v806
    %951 = vmatpush1.msra.mxu0 %v805
    %952 = vmatprep.subr.mxu0 %v802
    %953 = vmatpush1.msra.mxu0 %v801
    %954 = vmatprep.subr.mxu0 %v798
    %955 = vmatpush1.msra.mxu0 %v797
    %956 = vmatprep.subr.mxu0 %v794
    %957 = vmatpush1.msra.mxu0 %v793
    %958 = vmatprep.subr.mxu0 0.0
    %959 = vmatpush2.msra.mxu0 0.0
    %960 = vmatprep.subr.mxu0 0.0
    %961 = vmatpush2.msra.mxu0 0.0
    %962 = vmatprep.subr.mxu0 0.0
    %963 = vmatpush2.msra.mxu0 0.0
    %964 = vmatprep.subr.mxu0 0.0
    %965 = vmatpush2.msra.mxu0 0.0
    %966 = vmatprep.subr.mxu0 0.0
    %967 = vmatpush2.msra.mxu0 0.0
    %968 = vmatprep.subr.mxu0 0.0
    %969 = vmatpush2.msra.mxu0 0.0
    %970 = vmatprep.subr.mxu0 0.0
    %971 = vmatpush2.msra.mxu0 0.0
    %972 = vmatprep.subr.mxu0 0.0
    %973 = vmatpush2.msra.mxu0 0.0
    %974 = vmatprep.subr.mxu0 0.0
    %975 = vmatpush2.msra.mxu0 0.0
    %976 = vmatprep.subr.mxu0 0.0
    %977 = vmatpush2.msra.mxu0 0.0
    %978 = vmatprep.subr.mxu0 0.0
    %979 = vmatpush2.msra.mxu0 0.0
    %980 = vmatprep.subr.mxu0 0.0
    %981 = vmatpush2.msra.mxu0 0.0
    %982 = vmatprep.subr.mxu0 0.0
    %983 = vmatpush2.msra.mxu0 0.0
    %984 = vmatprep.subr.mxu0 0.0
    %985 = vmatpush2.msra.mxu0 0.0
    %986 = vmatprep.subr.mxu0 0.0
    %987 = vmatpush2.msra.mxu0 0.0
    %988 = vmatprep.subr.mxu0 0.0
    %989 = vmatpush2.msra.mxu0 0.0
    %990 = vmatprep.mubr.f32.mxu0 0.0
    %991 = vmatmul.mubr.f32.gmra.mxu0 %v790
    %v992 = vpop.f32.mrf.mxu0
    %v993 = vadd.f32 0.0, %v992
    %v994 = vpop.f32.mrf.mxu0
    %v995 = vadd.f32 0.0, %v994
    %996 = vdwg.mxu0
    %v1001 = vcombine.low %v922, %v924
    %v1002 = vcombine.low %v993, %v995
    %v1004 = vunpack.c.l.s4 1983009808
    %v1005 = vunpack.c.0.s8 %v1004
    %v1006 = vlaneseq
    %v1007 = vshrl.u32 %v1006, 7
    %v1008 = vsub.s32 %v1005, %v1007
    %v1009 = vrot.slane %v1001, %v1008
    %v1011 = vunpack.c.l.s4 1983009808
    %v1012 = vunpack.c.0.s8 %v1011
    %v1013 = vlaneseq
    %v1014 = vshrl.u32 %v1013, 7
    %v1015 = vsub.s32 %v1012, %v1014
    %v1016 = vrot.slane %v1002, %v1015
    %v1017 = vcombine.low %v1009, %v1016
    %v1019 = vadd.f32 %v789, %v1017
    %v1020 = vxor.u32 %v1019, 2147483648
    %v1021 = vmul.f32 %v1020, 1.442695
    %v1022 = vpow.pop %v1021
    %v1023 = vadd.f32 %v1022, 1.0
    %v1024 = vrcp.pop %v1023
    %v1025 = vmul.f32 1.0, %v1024
    %v1027 = vrot.slane %v1019, 6
    %v1029 = vtanh.pop %v1027
    %v1030 = vld [vmem:[#allocation3] sm:$0x3]
    %v1032 = vrot.slane %v1025, 2
    %v1034 = vmul.f32 %v1032, %v1030
    %v1035 = vmul.f32 %v1025, %v1029
    %v1036 = vadd.f32 %v1034, %v1035
    %v1037 = vtanh.pop %v1036
    %v1038 = vrot.slane %v1025, 4
    %v1040 = vmul.f32 %v1038, %v1037
    %1041 = vst [vmem:[#allocation2] sm:$0x3] %v1040
    %1042 = vst [vmem:[#allocation3] sm:$0x3] %v1036
    %s1043 = scalar_lea.vmem %s0, 32
    %v1044 = vld [vmem:[%s1043] sm:$0xff]
    %v1045 = vld [vmem:[#allocation2] sm:$0x3]
    %v1046 = vld [vmem:[%s1] sm:$0xff]
    %v1047 = vld [vmem:[%s1 + $0x8] sm:$0xff]
    %v1048 = vld [vmem:[%s1 + $0x10] sm:$0xff]
    %v1049 = vld [vmem:[%s1 + $0x18] sm:$0xff]
    %v1050 = vld [vmem:[%s1 + $0x20] sm:$0xff]
    %v1051 = vld [vmem:[%s1 + $0x28] sm:$0xff]
    %v1052 = vld [vmem:[%s1 + $0x30] sm:$0xff]
    %v1053 = vld [vmem:[%s1 + $0x38] sm:$0xff]
    %v1054 = vld [vmem:[%s1 + $0x40] sm:$0xff]
    %v1055 = vld [vmem:[%s1 + $0x48] sm:$0xff]
    %v1056 = vld [vmem:[%s1 + $0x50] sm:$0xff]
    %v1057 = vld [vmem:[%s1 + $0x58] sm:$0xff]
    %v1058 = vld [vmem:[%s1 + $0x60] sm:$0xff]
    %v1059 = vld [vmem:[%s1 + $0x68] sm:$0xff]
    %v1060 = vld [vmem:[%s1 + $0x70] sm:$0xff]
    %v1061 = vld [vmem:[%s1 + $0x78] sm:$0xff]
    %v1062 = vld [vmem:[%s1 + $0x80] sm:$0xff]
    %v1063 = vld [vmem:[%s1 + $0x88] sm:$0xff]
    %v1064 = vld [vmem:[%s1 + $0x90] sm:$0xff]
    %v1065 = vld [vmem:[%s1 + $0x98] sm:$0xff]
    %v1066 = vld [vmem:[%s1 + $0xa0] sm:$0xff]
    %v1067 = vld [vmem:[%s1 + $0xa8] sm:$0xff]
    %v1068 = vld [vmem:[%s1 + $0xb0] sm:$0xff]
    %v1069 = vld [vmem:[%s1 + $0xb8] sm:$0xff]
    %v1070 = vld [vmem:[%s1 + $0xc0] sm:$0xff]
    %v1071 = vld [vmem:[%s1 + $0xc8] sm:$0xff]
    %v1072 = vld [vmem:[%s1 + $0xd0] sm:$0xff]
    %v1073 = vld [vmem:[%s1 + $0xd8] sm:$0xff]
    %v1074 = vld [vmem:[%s1 + $0xe0] sm:$0xff]
    %v1075 = vld [vmem:[%s1 + $0xe8] sm:$0xff]
    %v1076 = vld [vmem:[%s1 + $0xf0] sm:$0xff]
    %v1077 = vld [vmem:[%s1 + $0xf8] sm:$0xff]
    %v1078 = vld [vmem:[%s1 + $0x100] sm:$0xff]
    %v1079 = vld [vmem:[%s1 + $0x108] sm:$0xff]
    %v1080 = vld [vmem:[%s1 + $0x110] sm:$0xff]
    %v1081 = vld [vmem:[%s1 + $0x118] sm:$0xff]
    %v1082 = vld [vmem:[%s1 + $0x120] sm:$0xff]
    %v1083 = vld [vmem:[%s1 + $0x128] sm:$0xff]
    %v1084 = vld [vmem:[%s1 + $0x130] sm:$0xff]
    %v1085 = vld [vmem:[%s1 + $0x138] sm:$0xff]
    %v1086 = vld [vmem:[%s1 + $0x140] sm:$0xff]
    %v1087 = vld [vmem:[%s1 + $0x148] sm:$0xff]
    %v1088 = vld [vmem:[%s1 + $0x150] sm:$0xff]
    %v1089 = vld [vmem:[%s1 + $0x158] sm:$0xff]
    %v1090 = vld [vmem:[%s1 + $0x160] sm:$0xff]
    %v1091 = vld [vmem:[%s1 + $0x168] sm:$0xff]
    %v1092 = vld [vmem:[%s1 + $0x170] sm:$0xff]
    %v1093 = vld [vmem:[%s1 + $0x178] sm:$0xff]
    %v1094 = vld [vmem:[%s1 + $0x180] sm:$0xff]
    %v1095 = vld [vmem:[%s1 + $0x188] sm:$0xff]
    %v1096 = vld [vmem:[%s1 + $0x190] sm:$0xff]
    %v1097 = vld [vmem:[%s1 + $0x198] sm:$0xff]
    %v1098 = vld [vmem:[%s1 + $0x1a0] sm:$0xff]
    %v1099 = vld [vmem:[%s1 + $0x1a8] sm:$0xff]
    %v1100 = vld [vmem:[%s1 + $0x1b0] sm:$0xff]
    %v1101 = vld [vmem:[%s1 + $0x1b8] sm:$0xff]
    %v1102 = vld [vmem:[%s1 + $0x1c0] sm:$0xff]
    %v1103 = vld [vmem:[%s1 + $0x1c8] sm:$0xff]
    %v1104 = vld [vmem:[%s1 + $0x1d0] sm:$0xff]
    %v1105 = vld [vmem:[%s1 + $0x1d8] sm:$0xff]
    %v1106 = vld [vmem:[%s1 + $0x1e0] sm:$0xff]
    %v1107 = vld [vmem:[%s1 + $0x1e8] sm:$0xff]
    %v1108 = vld [vmem:[%s1 + $0x1f0] sm:$0xff]
    %v1109 = vld [vmem:[%s1 + $0x1f8] sm:$0xff]
    %1110 = vmatprep.subr.mxu0 %v1107
    %1111 = vmatpush1.msra.mxu0 %v1106
    %1112 = vmatprep.subr.mxu0 %v1103
    %1113 = vmatpush1.msra.mxu0 %v1102
    %1114 = vmatprep.subr.mxu0 %v1099
    %1115 = vmatpush1.msra.mxu0 %v1098
    %1116 = vmatprep.subr.mxu0 %v1095
    %1117 = vmatpush1.msra.mxu0 %v1094
    %1118 = vmatprep.subr.mxu0 %v1091
    %1119 = vmatpush1.msra.mxu0 %v1090
    %1120 = vmatprep.subr.mxu0 %v1087
    %1121 = vmatpush1.msra.mxu0 %v1086
    %1122 = vmatprep.subr.mxu0 %v1083
    %1123 = vmatpush1.msra.mxu0 %v1082
    %1124 = vmatprep.subr.mxu0 %v1079
    %1125 = vmatpush1.msra.mxu0 %v1078
    %1126 = vmatprep.subr.mxu0 %v1075
    %1127 = vmatpush1.msra.mxu0 %v1074
    %1128 = vmatprep.subr.mxu0 %v1071
    %1129 = vmatpush1.msra.mxu0 %v1070
    %1130 = vmatprep.subr.mxu0 %v1067
    %1131 = vmatpush1.msra.mxu0 %v1066
    %1132 = vmatprep.subr.mxu0 %v1063
    %1133 = vmatpush1.msra.mxu0 %v1062
    %1134 = vmatprep.subr.mxu0 %v1059
    %1135 = vmatpush1.msra.mxu0 %v1058
    %1136 = vmatprep.subr.mxu0 %v1055
    %1137 = vmatpush1.msra.mxu0 %v1054
    %1138 = vmatprep.subr.mxu0 %v1051
    %1139 = vmatpush1.msra.mxu0 %v1050
    %1140 = vmatprep.subr.mxu0 %v1047
    %1141 = vmatpush1.msra.mxu0 %v1046
    %1142 = vmatprep.subr.mxu0 0.0
    %1143 = vmatpush2.msra.mxu0 0.0
    %1144 = vmatprep.subr.mxu0 0.0
    %1145 = vmatpush2.msra.mxu0 0.0
    %1146 = vmatprep.subr.mxu0 0.0
    %1147 = vmatpush2.msra.mxu0 0.0
    %1148 = vmatprep.subr.mxu0 0.0
    %1149 = vmatpush2.msra.mxu0 0.0
    %1150 = vmatprep.subr.mxu0 0.0
    %1151 = vmatpush2.msra.mxu0 0.0
    %1152 = vmatprep.subr.mxu0 0.0
    %1153 = vmatpush2.msra.mxu0 0.0
    %1154 = vmatprep.subr.mxu0 0.0
    %1155 = vmatpush2.msra.mxu0 0.0
    %1156 = vmatprep.subr.mxu0 0.0
    %1157 = vmatpush2.msra.mxu0 0.0
    %1158 = vmatprep.subr.mxu0 0.0
    %1159 = vmatpush2.msra.mxu0 0.0
    %1160 = vmatprep.subr.mxu0 0.0
    %1161 = vmatpush2.msra.mxu0 0.0
    %1162 = vmatprep.subr.mxu0 0.0
    %1163 = vmatpush2.msra.mxu0 0.0
    %1164 = vmatprep.subr.mxu0 0.0
    %1165 = vmatpush2.msra.mxu0 0.0
    %1166 = vmatprep.subr.mxu0 0.0
    %1167 = vmatpush2.msra.mxu0 0.0
    %1168 = vmatprep.subr.mxu0 0.0
    %1169 = vmatpush2.msra.mxu0 0.0
    %1170 = vmatprep.subr.mxu0 0.0
    %1171 = vmatpush2.msra.mxu0 0.0
    %1172 = vmatprep.subr.mxu0 0.0
    %1173 = vmatpush2.msra.mxu0 0.0
    %1174 = vmatprep.mubr.f32.mxu0 0.0
    %1175 = vmatmul.mubr.f32.gmra.mxu0 %v1045
    %v1176 = vpop.f32.mrf.mxu0
    %v1177 = vadd.f32 0.0, %v1176
    %v1178 = vpop.f32.mrf.mxu0
    %v1179 = vadd.f32 0.0, %v1178
    %1180 = vdwg.mxu0
    %1181 = vmatprep.subr.mxu0 %v1109
    %1182 = vmatpush1.msra.mxu0 %v1108
    %1183 = vmatprep.subr.mxu0 %v1105
    %1184 = vmatpush1.msra.mxu0 %v1104
    %1185 = vmatprep.subr.mxu0 %v1101
    %1186 = vmatpush1.msra.mxu0 %v1100
    %1187 = vmatprep.subr.mxu0 %v1097
    %1188 = vmatpush1.msra.mxu0 %v1096
    %1189 = vmatprep.subr.mxu0 %v1093
    %1190 = vmatpush1.msra.mxu0 %v1092
    %1191 = vmatprep.subr.mxu0 %v1089
    %1192 = vmatpush1.msra.mxu0 %v1088
    %1193 = vmatprep.subr.mxu0 %v1085
    %1194 = vmatpush1.msra.mxu0 %v1084
    %1195 = vmatprep.subr.mxu0 %v1081
    %1196 = vmatpush1.msra.mxu0 %v1080
    %1197 = vmatprep.subr.mxu0 %v1077
    %1198 = vmatpush1.msra.mxu0 %v1076
    %1199 = vmatprep.subr.mxu0 %v1073
    %1200 = vmatpush1.msra.mxu0 %v1072
    %1201 = vmatprep.subr.mxu0 %v1069
    %1202 = vmatpush1.msra.mxu0 %v1068
    %1203 = vmatprep.subr.mxu0 %v1065
    %1204 = vmatpush1.msra.mxu0 %v1064
    %1205 = vmatprep.subr.mxu0 %v1061
    %1206 = vmatpush1.msra.mxu0 %v1060
    %1207 = vmatprep.subr.mxu0 %v1057
    %1208 = vmatpush1.msra.mxu0 %v1056
    %1209 = vmatprep.subr.mxu0 %v1053
    %1210 = vmatpush1.msra.mxu0 %v1052
    %1211 = vmatprep.subr.mxu0 %v1049
    %1212 = vmatpush1.msra.mxu0 %v1048
    %1213 = vmatprep.subr.mxu0 0.0
    %1214 = vmatpush2.msra.mxu0 0.0
    %1215 = vmatprep.subr.mxu0 0.0
    %1216 = vmatpush2.msra.mxu0 0.0
    %1217 = vmatprep.subr.mxu0 0.0
    %1218 = vmatpush2.msra.mxu0 0.0
    %1219 = vmatprep.subr.mxu0 0.0
    %1220 = vmatpush2.msra.mxu0 0.0
    %1221 = vmatprep.subr.mxu0 0.0
    %1222 = vmatpush2.msra.mxu0 0.0
    %1223 = vmatprep.subr.mxu0 0.0
    %1224 = vmatpush2.msra.mxu0 0.0
    %1225 = vmatprep.subr.mxu0 0.0
    %1226 = vmatpush2.msra.mxu0 0.0
    %1227 = vmatprep.subr.mxu0 0.0
    %1228 = vmatpush2.msra.mxu0 0.0
    %1229 = vmatprep.subr.mxu0 0.0
    %1230 = vmatpush2.msra.mxu0 0.0
    %1231 = vmatprep.subr.mxu0 0.0
    %1232 = vmatpush2.msra.mxu0 0.0
    %1233 = vmatprep.subr.mxu0 0.0
    %1234 = vmatpush2.msra.mxu0 0.0
    %1235 = vmatprep.subr.mxu0 0.0
    %1236 = vmatpush2.msra.mxu0 0.0
    %1237 = vmatprep.subr.mxu0 0.0
    %1238 = vmatpush2.msra.mxu0 0.0
    %1239 = vmatprep.subr.mxu0 0.0
    %1240 = vmatpush2.msra.mxu0 0.0
    %1241 = vmatprep.subr.mxu0 0.0
    %1242 = vmatpush2.msra.mxu0 0.0
    %1243 = vmatprep.subr.mxu0 0.0
    %1244 = vmatpush2.msra.mxu0 0.0
    %1245 = vmatprep.mubr.f32.mxu0 0.0
    %1246 = vmatmul.mubr.f32.gmra.mxu0 %v1045
    %v1247 = vpop.f32.mrf.mxu0
    %v1248 = vadd.f32 0.0, %v1247
    %v1249 = vpop.f32.mrf.mxu0
    %v1250 = vadd.f32 0.0, %v1249
    %1251 = vdwg.mxu0
    %v1256 = vcombine.low %v1177, %v1179
    %v1257 = vcombine.low %v1248, %v1250
    %v1259 = vunpack.c.l.s4 1983009808
    %v1260 = vunpack.c.0.s8 %v1259
    %v1261 = vlaneseq
    %v1262 = vshrl.u32 %v1261, 7
    %v1263 = vsub.s32 %v1260, %v1262
    %v1264 = vrot.slane %v1256, %v1263
    %v1266 = vunpack.c.l.s4 1983009808
    %v1267 = vunpack.c.0.s8 %v1266
    %v1268 = vlaneseq
    %v1269 = vshrl.u32 %v1268, 7
    %v1270 = vsub.s32 %v1267, %v1269
    %v1271 = vrot.slane %v1257, %v1270
    %v1272 = vcombine.low %v1264, %v1271
    %v1274 = vadd.f32 %v1044, %v1272
    %v1275 = vxor.u32 %v1274, 2147483648
    %v1276 = vmul.f32 %v1275, 1.442695
    %v1277 = vpow.pop %v1276
    %v1278 = vadd.f32 %v1277, 1.0
    %v1279 = vrcp.pop %v1278
    %v1280 = vmul.f32 1.0, %v1279
    %v1282 = vrot.slane %v1274, 6
    %v1284 = vtanh.pop %v1282
    %v1285 = vld [vmem:[#allocation3] sm:$0x3]
    %v1287 = vrot.slane %v1280, 2
    %v1289 = vmul.f32 %v1287, %v1285
    %v1290 = vmul.f32 %v1280, %v1284
    %v1291 = vadd.f32 %v1289, %v1290
    %v1292 = vtanh.pop %v1291
    %v1293 = vrot.slane %v1280, 4
    %v1295 = vmul.f32 %v1293, %v1292
    %1296 = vst [vmem:[#allocation2] sm:$0x3] %v1295
    %1297 = vst [vmem:[#allocation3] sm:$0x3] %v1291
    %s1298 = scalar_lea.vmem %s0, 40
    %v1299 = vld [vmem:[%s1298] sm:$0xff]
    %v1300 = vld [vmem:[#allocation2] sm:$0x3]
    %v1301 = vld [vmem:[%s1] sm:$0xff]
    %v1302 = vld [vmem:[%s1 + $0x8] sm:$0xff]
    %v1303 = vld [vmem:[%s1 + $0x10] sm:$0xff]
    %v1304 = vld [vmem:[%s1 + $0x18] sm:$0xff]
    %v1305 = vld [vmem:[%s1 + $0x20] sm:$0xff]
    %v1306 = vld [vmem:[%s1 + $0x28] sm:$0xff]
    %v1307 = vld [vmem:[%s1 + $0x30] sm:$0xff]
    %v1308 = vld [vmem:[%s1 + $0x38] sm:$0xff]
    %v1309 = vld [vmem:[%s1 + $0x40] sm:$0xff]
    %v1310 = vld [vmem:[%s1 + $0x48] sm:$0xff]
    %v1311 = vld [vmem:[%s1 + $0x50] sm:$0xff]
    %v1312 = vld [vmem:[%s1 + $0x58] sm:$0xff]
    %v1313 = vld [vmem:[%s1 + $0x60] sm:$0xff]
    %v1314 = vld [vmem:[%s1 + $0x68] sm:$0xff]
    %v1315 = vld [vmem:[%s1 + $0x70] sm:$0xff]
    %v1316 = vld [vmem:[%s1 + $0x78] sm:$0xff]
    %v1317 = vld [vmem:[%s1 + $0x80] sm:$0xff]
    %v1318 = vld [vmem:[%s1 + $0x88] sm:$0xff]
    %v1319 = vld [vmem:[%s1 + $0x90] sm:$0xff]
    %v1320 = vld [vmem:[%s1 + $0x98] sm:$0xff]
    %v1321 = vld [vmem:[%s1 + $0xa0] sm:$0xff]
    %v1322 = vld [vmem:[%s1 + $0xa8] sm:$0xff]
    %v1323 = vld [vmem:[%s1 + $0xb0] sm:$0xff]
    %v1324 = vld [vmem:[%s1 + $0xb8] sm:$0xff]
    %v1325 = vld [vmem:[%s1 + $0xc0] sm:$0xff]
    %v1326 = vld [vmem:[%s1 + $0xc8] sm:$0xff]
    %v1327 = vld [vmem:[%s1 + $0xd0] sm:$0xff]
    %v1328 = vld [vmem:[%s1 + $0xd8] sm:$0xff]
    %v1329 = vld [vmem:[%s1 + $0xe0] sm:$0xff]
    %v1330 = vld [vmem:[%s1 + $0xe8] sm:$0xff]
    %v1331 = vld [vmem:[%s1 + $0xf0] sm:$0xff]
    %v1332 = vld [vmem:[%s1 + $0xf8] sm:$0xff]
    %v1333 = vld [vmem:[%s1 + $0x100] sm:$0xff]
    %v1334 = vld [vmem:[%s1 + $0x108] sm:$0xff]
    %v1335 = vld [vmem:[%s1 + $0x110] sm:$0xff]
    %v1336 = vld [vmem:[%s1 + $0x118] sm:$0xff]
    %v1337 = vld [vmem:[%s1 + $0x120] sm:$0xff]
    %v1338 = vld [vmem:[%s1 + $0x128] sm:$0xff]
    %v1339 = vld [vmem:[%s1 + $0x130] sm:$0xff]
    %v1340 = vld [vmem:[%s1 + $0x138] sm:$0xff]
    %v1341 = vld [vmem:[%s1 + $0x140] sm:$0xff]
    %v1342 = vld [vmem:[%s1 + $0x148] sm:$0xff]
    %v1343 = vld [vmem:[%s1 + $0x150] sm:$0xff]
    %v1344 = vld [vmem:[%s1 + $0x158] sm:$0xff]
    %v1345 = vld [vmem:[%s1 + $0x160] sm:$0xff]
    %v1346 = vld [vmem:[%s1 + $0x168] sm:$0xff]
    %v1347 = vld [vmem:[%s1 + $0x170] sm:$0xff]
    %v1348 = vld [vmem:[%s1 + $0x178] sm:$0xff]
    %v1349 = vld [vmem:[%s1 + $0x180] sm:$0xff]
    %v1350 = vld [vmem:[%s1 + $0x188] sm:$0xff]
    %v1351 = vld [vmem:[%s1 + $0x190] sm:$0xff]
    %v1352 = vld [vmem:[%s1 + $0x198] sm:$0xff]
    %v1353 = vld [vmem:[%s1 + $0x1a0] sm:$0xff]
    %v1354 = vld [vmem:[%s1 + $0x1a8] sm:$0xff]
    %v1355 = vld [vmem:[%s1 + $0x1b0] sm:$0xff]
    %v1356 = vld [vmem:[%s1 + $0x1b8] sm:$0xff]
    %v1357 = vld [vmem:[%s1 + $0x1c0] sm:$0xff]
    %v1358 = vld [vmem:[%s1 + $0x1c8] sm:$0xff]
    %v1359 = vld [vmem:[%s1 + $0x1d0] sm:$0xff]
    %v1360 = vld [vmem:[%s1 + $0x1d8] sm:$0xff]
    %v1361 = vld [vmem:[%s1 + $0x1e0] sm:$0xff]
    %v1362 = vld [vmem:[%s1 + $0x1e8] sm:$0xff]
    %v1363 = vld [vmem:[%s1 + $0x1f0] sm:$0xff]
    %v1364 = vld [vmem:[%s1 + $0x1f8] sm:$0xff]
    %1365 = vmatprep.subr.mxu0 %v1362
    %1366 = vmatpush1.msra.mxu0 %v1361
    %1367 = vmatprep.subr.mxu0 %v1358
    %1368 = vmatpush1.msra.mxu0 %v1357
    %1369 = vmatprep.subr.mxu0 %v1354
    %1370 = vmatpush1.msra.mxu0 %v1353
    %1371 = vmatprep.subr.mxu0 %v1350
    %1372 = vmatpush1.msra.mxu0 %v1349
    %1373 = vmatprep.subr.mxu0 %v1346
    %1374 = vmatpush1.msra.mxu0 %v1345
    %1375 = vmatprep.subr.mxu0 %v1342
    %1376 = vmatpush1.msra.mxu0 %v1341
    %1377 = vmatprep.subr.mxu0 %v1338
    %1378 = vmatpush1.msra.mxu0 %v1337
    %1379 = vmatprep.subr.mxu0 %v1334
    %1380 = vmatpush1.msra.mxu0 %v1333
    %1381 = vmatprep.subr.mxu0 %v1330
    %1382 = vmatpush1.msra.mxu0 %v1329
    %1383 = vmatprep.subr.mxu0 %v1326
    %1384 = vmatpush1.msra.mxu0 %v1325
    %1385 = vmatprep.subr.mxu0 %v1322
    %1386 = vmatpush1.msra.mxu0 %v1321
    %1387 = vmatprep.subr.mxu0 %v1318
    %1388 = vmatpush1.msra.mxu0 %v1317
    %1389 = vmatprep.subr.mxu0 %v1314
    %1390 = vmatpush1.msra.mxu0 %v1313
    %1391 = vmatprep.subr.mxu0 %v1310
    %1392 = vmatpush1.msra.mxu0 %v1309
    %1393 = vmatprep.subr.mxu0 %v1306
    %1394 = vmatpush1.msra.mxu0 %v1305
    %1395 = vmatprep.subr.mxu0 %v1302
    %1396 = vmatpush1.msra.mxu0 %v1301
    %1397 = vmatprep.subr.mxu0 0.0
    %1398 = vmatpush2.msra.mxu0 0.0
    %1399 = vmatprep.subr.mxu0 0.0
    %1400 = vmatpush2.msra.mxu0 0.0
    %1401 = vmatprep.subr.mxu0 0.0
    %1402 = vmatpush2.msra.mxu0 0.0
    %1403 = vmatprep.subr.mxu0 0.0
    %1404 = vmatpush2.msra.mxu0 0.0
    %1405 = vmatprep.subr.mxu0 0.0
    %1406 = vmatpush2.msra.mxu0 0.0
    %1407 = vmatprep.subr.mxu0 0.0
    %1408 = vmatpush2.msra.mxu0 0.0
    %1409 = vmatprep.subr.mxu0 0.0
    %1410 = vmatpush2.msra.mxu0 0.0
    %1411 = vmatprep.subr.mxu0 0.0
    %1412 = vmatpush2.msra.mxu0 0.0
    %1413 = vmatprep.subr.mxu0 0.0
    %1414 = vmatpush2.msra.mxu0 0.0
    %1415 = vmatprep.subr.mxu0 0.0
    %1416 = vmatpush2.msra.mxu0 0.0
    %1417 = vmatprep.subr.mxu0 0.0
    %1418 = vmatpush2.msra.mxu0 0.0
    %1419 = vmatprep.subr.mxu0 0.0
    %1420 = vmatpush2.msra.mxu0 0.0
    %1421 = vmatprep.subr.mxu0 0.0
    %1422 = vmatpush2.msra.mxu0 0.0
    %1423 = vmatprep.subr.mxu0 0.0
    %1424 = vmatpush2.msra.mxu0 0.0
    %1425 = vmatprep.subr.mxu0 0.0
    %1426 = vmatpush2.msra.mxu0 0.0
    %1427 = vmatprep.subr.mxu0 0.0
    %1428 = vmatpush2.msra.mxu0 0.0
    %1429 = vmatprep.mubr.f32.mxu0 0.0
    %1430 = vmatmul.mubr.f32.gmra.mxu0 %v1300
    %v1431 = vpop.f32.mrf.mxu0
    %v1432 = vadd.f32 0.0, %v1431
    %v1433 = vpop.f32.mrf.mxu0
    %v1434 = vadd.f32 0.0, %v1433
    %1435 = vdwg.mxu0
    %1436 = vmatprep.subr.mxu0 %v1364
    %1437 = vmatpush1.msra.mxu0 %v1363
    %1438 = vmatprep.subr.mxu0 %v1360
    %1439 = vmatpush1.msra.mxu0 %v1359
    %1440 = vmatprep.subr.mxu0 %v1356
    %1441 = vmatpush1.msra.mxu0 %v1355
    %1442 = vmatprep.subr.mxu0 %v1352
    %1443 = vmatpush1.msra.mxu0 %v1351
    %1444 = vmatprep.subr.mxu0 %v1348
    %1445 = vmatpush1.msra.mxu0 %v1347
    %1446 = vmatprep.subr.mxu0 %v1344
    %1447 = vmatpush1.msra.mxu0 %v1343
    %1448 = vmatprep.subr.mxu0 %v1340
    %1449 = vmatpush1.msra.mxu0 %v1339
    %1450 = vmatprep.subr.mxu0 %v1336
    %1451 = vmatpush1.msra.mxu0 %v1335
    %1452 = vmatprep.subr.mxu0 %v1332
    %1453 = vmatpush1.msra.mxu0 %v1331
    %1454 = vmatprep.subr.mxu0 %v1328
    %1455 = vmatpush1.msra.mxu0 %v1327
    %1456 = vmatprep.subr.mxu0 %v1324
    %1457 = vmatpush1.msra.mxu0 %v1323
    %1458 = vmatprep.subr.mxu0 %v1320
    %1459 = vmatpush1.msra.mxu0 %v1319
    %1460 = vmatprep.subr.mxu0 %v1316
    %1461 = vmatpush1.msra.mxu0 %v1315
    %1462 = vmatprep.subr.mxu0 %v1312
    %1463 = vmatpush1.msra.mxu0 %v1311
    %1464 = vmatprep.subr.mxu0 %v1308
    %1465 = vmatpush1.msra.mxu0 %v1307
    %1466 = vmatprep.subr.mxu0 %v1304
    %1467 = vmatpush1.msra.mxu0 %v1303
    %1468 = vmatprep.subr.mxu0 0.0
    %1469 = vmatpush2.msra.mxu0 0.0
    %1470 = vmatprep.subr.mxu0 0.0
    %1471 = vmatpush2.msra.mxu0 0.0
    %1472 = vmatprep.subr.mxu0 0.0
    %1473 = vmatpush2.msra.mxu0 0.0
    %1474 = vmatprep.subr.mxu0 0.0
    %1475 = vmatpush2.msra.mxu0 0.0
    %1476 = vmatprep.subr.mxu0 0.0
    %1477 = vmatpush2.msra.mxu0 0.0
    %1478 = vmatprep.subr.mxu0 0.0
    %1479 = vmatpush2.msra.mxu0 0.0
    %1480 = vmatprep.subr.mxu0 0.0
    %1481 = vmatpush2.msra.mxu0 0.0
    %1482 = vmatprep.subr.mxu0 0.0
    %1483 = vmatpush2.msra.mxu0 0.0
    %1484 = vmatprep.subr.mxu0 0.0
    %1485 = vmatpush2.msra.mxu0 0.0
    %1486 = vmatprep.subr.mxu0 0.0
    %1487 = vmatpush2.msra.mxu0 0.0
    %1488 = vmatprep.subr.mxu0 0.0
    %1489 = vmatpush2.msra.mxu0 0.0
    %1490 = vmatprep.subr.mxu0 0.0
    %1491 = vmatpush2.msra.mxu0 0.0
    %1492 = vmatprep.subr.mxu0 0.0
    %1493 = vmatpush2.msra.mxu0 0.0
    %1494 = vmatprep.subr.mxu0 0.0
    %1495 = vmatpush2.msra.mxu0 0.0
    %1496 = vmatprep.subr.mxu0 0.0
    %1497 = vmatpush2.msra.mxu0 0.0
    %1498 = vmatprep.subr.mxu0 0.0
    %1499 = vmatpush2.msra.mxu0 0.0
    %1500 = vmatprep.mubr.f32.mxu0 0.0
    %1501 = vmatmul.mubr.f32.gmra.mxu0 %v1300
    %v1502 = vpop.f32.mrf.mxu0
    %v1503 = vadd.f32 0.0, %v1502
    %v1504 = vpop.f32.mrf.mxu0
    %v1505 = vadd.f32 0.0, %v1504
    %1506 = vdwg.mxu0
    %v1511 = vcombine.low %v1432, %v1434
    %v1512 = vcombine.low %v1503, %v1505
    %v1514 = vunpack.c.l.s4 1983009808
    %v1515 = vunpack.c.0.s8 %v1514
    %v1516 = vlaneseq
    %v1517 = vshrl.u32 %v1516, 7
    %v1518 = vsub.s32 %v1515, %v1517
    %v1519 = vrot.slane %v1511, %v1518
    %v1521 = vunpack.c.l.s4 1983009808
    %v1522 = vunpack.c.0.s8 %v1521
    %v1523 = vlaneseq
    %v1524 = vshrl.u32 %v1523, 7
    %v1525 = vsub.s32 %v1522, %v1524
    %v1526 = vrot.slane %v1512, %v1525
    %v1527 = vcombine.low %v1519, %v1526
    %v1529 = vadd.f32 %v1299, %v1527
    %v1530 = vxor.u32 %v1529, 2147483648
    %v1531 = vmul.f32 %v1530, 1.442695
    %v1532 = vpow.pop %v1531
    %v1533 = vadd.f32 %v1532, 1.0
    %v1534 = vrcp.pop %v1533
    %v1535 = vmul.f32 1.0, %v1534
    %v1537 = vrot.slane %v1529, 6
    %v1539 = vtanh.pop %v1537
    %v1540 = vld [vmem:[#allocation3] sm:$0x3]
    %v1542 = vrot.slane %v1535, 2
    %v1544 = vmul.f32 %v1542, %v1540
    %v1545 = vmul.f32 %v1535, %v1539
    %v1546 = vadd.f32 %v1544, %v1545
    %v1547 = vtanh.pop %v1546
    %v1548 = vrot.slane %v1535, 4
    %v1550 = vmul.f32 %v1548, %v1547
    %1551 = vst [vmem:[#allocation2] sm:$0x3] %v1550
    %1552 = vst [vmem:[#allocation3] sm:$0x3] %v1546
    %s1553 = scalar_lea.vmem %s0, 48
    %v1554 = vld [vmem:[%s1553] sm:$0xff]
    %v1555 = vld [vmem:[#allocation2] sm:$0x3]
    %v1556 = vld [vmem:[%s1] sm:$0xff]
    %v1557 = vld [vmem:[%s1 + $0x8] sm:$0xff]
    %v1558 = vld [vmem:[%s1 + $0x10] sm:$0xff]
    %v1559 = vld [vmem:[%s1 + $0x18] sm:$0xff]
    %v1560 = vld [vmem:[%s1 + $0x20] sm:$0xff]
    %v1561 = vld [vmem:[%s1 + $0x28] sm:$0xff]
    %v1562 = vld [vmem:[%s1 + $0x30] sm:$0xff]
    %v1563 = vld [vmem:[%s1 + $0x38] sm:$0xff]
    %v1564 = vld [vmem:[%s1 + $0x40] sm:$0xff]
    %v1565 = vld [vmem:[%s1 + $0x48] sm:$0xff]
    %v1566 = vld [vmem:[%s1 + $0x50] sm:$0xff]
    %v1567 = vld [vmem:[%s1 + $0x58] sm:$0xff]
    %v1568 = vld [vmem:[%s1 + $0x60] sm:$0xff]
    %v1569 = vld [vmem:[%s1 + $0x68] sm:$0xff]
    %v1570 = vld [vmem:[%s1 + $0x70] sm:$0xff]
    %v1571 = vld [vmem:[%s1 + $0x78] sm:$0xff]
    %v1572 = vld [vmem:[%s1 + $0x80] sm:$0xff]
    %v1573 = vld [vmem:[%s1 + $0x88] sm:$0xff]
    %v1574 = vld [vmem:[%s1 + $0x90] sm:$0xff]
    %v1575 = vld [vmem:[%s1 + $0x98] sm:$0xff]
    %v1576 = vld [vmem:[%s1 + $0xa0] sm:$0xff]
    %v1577 = vld [vmem:[%s1 + $0xa8] sm:$0xff]
    %v1578 = vld [vmem:[%s1 + $0xb0] sm:$0xff]
    %v1579 = vld [vmem:[%s1 + $0xb8] sm:$0xff]
    %v1580 = vld [vmem:[%s1 + $0xc0] sm:$0xff]
    %v1581 = vld [vmem:[%s1 + $0xc8] sm:$0xff]
    %v1582 = vld [vmem:[%s1 + $0xd0] sm:$0xff]
    %v1583 = vld [vmem:[%s1 + $0xd8] sm:$0xff]
    %v1584 = vld [vmem:[%s1 + $0xe0] sm:$0xff]
    %v1585 = vld [vmem:[%s1 + $0xe8] sm:$0xff]
    %v1586 = vld [vmem:[%s1 + $0xf0] sm:$0xff]
    %v1587 = vld [vmem:[%s1 + $0xf8] sm:$0xff]
    %v1588 = vld [vmem:[%s1 + $0x100] sm:$0xff]
    %v1589 = vld [vmem:[%s1 + $0x108] sm:$0xff]
    %v1590 = vld [vmem:[%s1 + $0x110] sm:$0xff]
    %v1591 = vld [vmem:[%s1 + $0x118] sm:$0xff]
    %v1592 = vld [vmem:[%s1 + $0x120] sm:$0xff]
    %v1593 = vld [vmem:[%s1 + $0x128] sm:$0xff]
    %v1594 = vld [vmem:[%s1 + $0x130] sm:$0xff]
    %v1595 = vld [vmem:[%s1 + $0x138] sm:$0xff]
    %v1596 = vld [vmem:[%s1 + $0x140] sm:$0xff]
    %v1597 = vld [vmem:[%s1 + $0x148] sm:$0xff]
    %v1598 = vld [vmem:[%s1 + $0x150] sm:$0xff]
    %v1599 = vld [vmem:[%s1 + $0x158] sm:$0xff]
    %v1600 = vld [vmem:[%s1 + $0x160] sm:$0xff]
    %v1601 = vld [vmem:[%s1 + $0x168] sm:$0xff]
    %v1602 = vld [vmem:[%s1 + $0x170] sm:$0xff]
    %v1603 = vld [vmem:[%s1 + $0x178] sm:$0xff]
    %v1604 = vld [vmem:[%s1 + $0x180] sm:$0xff]
    %v1605 = vld [vmem:[%s1 + $0x188] sm:$0xff]
    %v1606 = vld [vmem:[%s1 + $0x190] sm:$0xff]
    %v1607 = vld [vmem:[%s1 + $0x198] sm:$0xff]
    %v1608 = vld [vmem:[%s1 + $0x1a0] sm:$0xff]
    %v1609 = vld [vmem:[%s1 + $0x1a8] sm:$0xff]
    %v1610 = vld [vmem:[%s1 + $0x1b0] sm:$0xff]
    %v1611 = vld [vmem:[%s1 + $0x1b8] sm:$0xff]
    %v1612 = vld [vmem:[%s1 + $0x1c0] sm:$0xff]
    %v1613 = vld [vmem:[%s1 + $0x1c8] sm:$0xff]
    %v1614 = vld [vmem:[%s1 + $0x1d0] sm:$0xff]
    %v1615 = vld [vmem:[%s1 + $0x1d8] sm:$0xff]
    %v1616 = vld [vmem:[%s1 + $0x1e0] sm:$0xff]
    %v1617 = vld [vmem:[%s1 + $0x1e8] sm:$0xff]
    %v1618 = vld [vmem:[%s1 + $0x1f0] sm:$0xff]
    %v1619 = vld [vmem:[%s1 + $0x1f8] sm:$0xff]
    %1620 = vmatprep.subr.mxu0 %v1617
    %1621 = vmatpush1.msra.mxu0 %v1616
    %1622 = vmatprep.subr.mxu0 %v1613
    %1623 = vmatpush1.msra.mxu0 %v1612
    %1624 = vmatprep.subr.mxu0 %v1609
    %1625 = vmatpush1.msra.mxu0 %v1608
    %1626 = vmatprep.subr.mxu0 %v1605
    %1627 = vmatpush1.msra.mxu0 %v1604
    %1628 = vmatprep.subr.mxu0 %v1601
    %1629 = vmatpush1.msra.mxu0 %v1600
    %1630 = vmatprep.subr.mxu0 %v1597
    %1631 = vmatpush1.msra.mxu0 %v1596
    %1632 = vmatprep.subr.mxu0 %v1593
    %1633 = vmatpush1.msra.mxu0 %v1592
    %1634 = vmatprep.subr.mxu0 %v1589
    %1635 = vmatpush1.msra.mxu0 %v1588
    %1636 = vmatprep.subr.mxu0 %v1585
    %1637 = vmatpush1.msra.mxu0 %v1584
    %1638 = vmatprep.subr.mxu0 %v1581
    %1639 = vmatpush1.msra.mxu0 %v1580
    %1640 = vmatprep.subr.mxu0 %v1577
    %1641 = vmatpush1.msra.mxu0 %v1576
    %1642 = vmatprep.subr.mxu0 %v1573
    %1643 = vmatpush1.msra.mxu0 %v1572
    %1644 = vmatprep.subr.mxu0 %v1569
    %1645 = vmatpush1.msra.mxu0 %v1568
    %1646 = vmatprep.subr.mxu0 %v1565
    %1647 = vmatpush1.msra.mxu0 %v1564
    %1648 = vmatprep.subr.mxu0 %v1561
    %1649 = vmatpush1.msra.mxu0 %v1560
    %1650 = vmatprep.subr.mxu0 %v1557
    %1651 = vmatpush1.msra.mxu0 %v1556
    %1652 = vmatprep.subr.mxu0 0.0
    %1653 = vmatpush2.msra.mxu0 0.0
    %1654 = vmatprep.subr.mxu0 0.0
    %1655 = vmatpush2.msra.mxu0 0.0
    %1656 = vmatprep.subr.mxu0 0.0
    %1657 = vmatpush2.msra.mxu0 0.0
    %1658 = vmatprep.subr.mxu0 0.0
    %1659 = vmatpush2.msra.mxu0 0.0
    %1660 = vmatprep.subr.mxu0 0.0
    %1661 = vmatpush2.msra.mxu0 0.0
    %1662 = vmatprep.subr.mxu0 0.0
    %1663 = vmatpush2.msra.mxu0 0.0
    %1664 = vmatprep.subr.mxu0 0.0
    %1665 = vmatpush2.msra.mxu0 0.0
    %1666 = vmatprep.subr.mxu0 0.0
    %1667 = vmatpush2.msra.mxu0 0.0
    %1668 = vmatprep.subr.mxu0 0.0
    %1669 = vmatpush2.msra.mxu0 0.0
    %1670 = vmatprep.subr.mxu0 0.0
    %1671 = vmatpush2.msra.mxu0 0.0
    %1672 = vmatprep.subr.mxu0 0.0
    %1673 = vmatpush2.msra.mxu0 0.0
    %1674 = vmatprep.subr.mxu0 0.0
    %1675 = vmatpush2.msra.mxu0 0.0
    %1676 = vmatprep.subr.mxu0 0.0
    %1677 = vmatpush2.msra.mxu0 0.0
    %1678 = vmatprep.subr.mxu0 0.0
    %1679 = vmatpush2.msra.mxu0 0.0
    %1680 = vmatprep.subr.mxu0 0.0
    %1681 = vmatpush2.msra.mxu0 0.0
    %1682 = vmatprep.subr.mxu0 0.0
    %1683 = vmatpush2.msra.mxu0 0.0
    %1684 = vmatprep.mubr.f32.mxu0 0.0
    %1685 = vmatmul.mubr.f32.gmra.mxu0 %v1555
    %v1686 = vpop.f32.mrf.mxu0
    %v1687 = vadd.f32 0.0, %v1686
    %v1688 = vpop.f32.mrf.mxu0
    %v1689 = vadd.f32 0.0, %v1688
    %1690 = vdwg.mxu0
    %1691 = vmatprep.subr.mxu0 %v1619
    %1692 = vmatpush1.msra.mxu0 %v1618
    %1693 = vmatprep.subr.mxu0 %v1615
    %1694 = vmatpush1.msra.mxu0 %v1614
    %1695 = vmatprep.subr.mxu0 %v1611
    %1696 = vmatpush1.msra.mxu0 %v1610
    %1697 = vmatprep.subr.mxu0 %v1607
    %1698 = vmatpush1.msra.mxu0 %v1606
    %1699 = vmatprep.subr.mxu0 %v1603
    %1700 = vmatpush1.msra.mxu0 %v1602
    %1701 = vmatprep.subr.mxu0 %v1599
    %1702 = vmatpush1.msra.mxu0 %v1598
    %1703 = vmatprep.subr.mxu0 %v1595
    %1704 = vmatpush1.msra.mxu0 %v1594
    %1705 = vmatprep.subr.mxu0 %v1591
    %1706 = vmatpush1.msra.mxu0 %v1590
    %1707 = vmatprep.subr.mxu0 %v1587
    %1708 = vmatpush1.msra.mxu0 %v1586
    %1709 = vmatprep.subr.mxu0 %v1583
    %1710 = vmatpush1.msra.mxu0 %v1582
    %1711 = vmatprep.subr.mxu0 %v1579
    %1712 = vmatpush1.msra.mxu0 %v1578
    %1713 = vmatprep.subr.mxu0 %v1575
    %1714 = vmatpush1.msra.mxu0 %v1574
    %1715 = vmatprep.subr.mxu0 %v1571
    %1716 = vmatpush1.msra.mxu0 %v1570
    %1717 = vmatprep.subr.mxu0 %v1567
    %1718 = vmatpush1.msra.mxu0 %v1566
    %1719 = vmatprep.subr.mxu0 %v1563
    %1720 = vmatpush1.msra.mxu0 %v1562
    %1721 = vmatprep.subr.mxu0 %v1559
    %1722 = vmatpush1.msra.mxu0 %v1558
    %1723 = vmatprep.subr.mxu0 0.0
    %1724 = vmatpush2.msra.mxu0 0.0
    %1725 = vmatprep.subr.mxu0 0.0
    %1726 = vmatpush2.msra.mxu0 0.0
    %1727 = vmatprep.subr.mxu0 0.0
    %1728 = vmatpush2.msra.mxu0 0.0
    %1729 = vmatprep.subr.mxu0 0.0
    %1730 = vmatpush2.msra.mxu0 0.0
    %1731 = vmatprep.subr.mxu0 0.0
    %1732 = vmatpush2.msra.mxu0 0.0
    %1733 = vmatprep.subr.mxu0 0.0
    %1734 = vmatpush2.msra.mxu0 0.0
    %1735 = vmatprep.subr.mxu0 0.0
    %1736 = vmatpush2.msra.mxu0 0.0
    %1737 = vmatprep.subr.mxu0 0.0
    %1738 = vmatpush2.msra.mxu0 0.0
    %1739 = vmatprep.subr.mxu0 0.0
    %1740 = vmatpush2.msra.mxu0 0.0
    %1741 = vmatprep.subr.mxu0 0.0
    %1742 = vmatpush2.msra.mxu0 0.0
    %1743 = vmatprep.subr.mxu0 0.0
    %1744 = vmatpush2.msra.mxu0 0.0
    %1745 = vmatprep.subr.mxu0 0.0
    %1746 = vmatpush2.msra.mxu0 0.0
    %1747 = vmatprep.subr.mxu0 0.0
    %1748 = vmatpush2.msra.mxu0 0.0
    %1749 = vmatprep.subr.mxu0 0.0
    %1750 = vmatpush2.msra.mxu0 0.0
    %1751 = vmatprep.subr.mxu0 0.0
    %1752 = vmatpush2.msra.mxu0 0.0
    %1753 = vmatprep.subr.mxu0 0.0
    %1754 = vmatpush2.msra.mxu0 0.0
    %1755 = vmatprep.mubr.f32.mxu0 0.0
    %1756 = vmatmul.mubr.f32.gmra.mxu0 %v1555
    %v1757 = vpop.f32.mrf.mxu0
    %v1758 = vadd.f32 0.0, %v1757
    %v1759 = vpop.f32.mrf.mxu0
    %v1760 = vadd.f32 0.0, %v1759
    %1761 = vdwg.mxu0
    %v1766 = vcombine.low %v1687, %v1689
    %v1767 = vcombine.low %v1758, %v1760
    %v1769 = vunpack.c.l.s4 1983009808
    %v1770 = vunpack.c.0.s8 %v1769
    %v1771 = vlaneseq
    %v1772 = vshrl.u32 %v1771, 7
    %v1773 = vsub.s32 %v1770, %v1772
    %v1774 = vrot.slane %v1766, %v1773
    %v1776 = vunpack.c.l.s4 1983009808
    %v1777 = vunpack.c.0.s8 %v1776
    %v1778 = vlaneseq
    %v1779 = vshrl.u32 %v1778, 7
    %v1780 = vsub.s32 %v1777, %v1779
    %v1781 = vrot.slane %v1767, %v1780
    %v1782 = vcombine.low %v1774, %v1781
    %v1784 = vadd.f32 %v1554, %v1782
    %v1785 = vxor.u32 %v1784, 2147483648
    %v1786 = vmul.f32 %v1785, 1.442695
    %v1787 = vpow.pop %v1786
    %v1788 = vadd.f32 %v1787, 1.0
    %v1789 = vrcp.pop %v1788
    %v1790 = vmul.f32 1.0, %v1789
    %v1792 = vrot.slane %v1784, 6
    %v1794 = vtanh.pop %v1792
    %v1795 = vld [vmem:[#allocation3] sm:$0x3]
    %v1797 = vrot.slane %v1790, 2
    %v1799 = vmul.f32 %v1797, %v1795
    %v1800 = vmul.f32 %v1790, %v1794
    %v1801 = vadd.f32 %v1799, %v1800
    %v1802 = vtanh.pop %v1801
    %v1803 = vrot.slane %v1790, 4
    %v1805 = vmul.f32 %v1803, %v1802
    %1806 = vst [vmem:[#allocation2] sm:$0x3] %v1805
    %1807 = vst [vmem:[#allocation3] sm:$0x3] %v1801
    %s1808 = scalar_lea.vmem %s0, 56
    %v1809 = vld [vmem:[%s1808] sm:$0xff]
    %v1810 = vld [vmem:[#allocation2] sm:$0x3]
    %v1811 = vld [vmem:[%s1] sm:$0xff]
    %v1812 = vld [vmem:[%s1 + $0x8] sm:$0xff]
    %v1813 = vld [vmem:[%s1 + $0x10] sm:$0xff]
    %v1814 = vld [vmem:[%s1 + $0x18] sm:$0xff]
    %v1815 = vld [vmem:[%s1 + $0x20] sm:$0xff]
    %v1816 = vld [vmem:[%s1 + $0x28] sm:$0xff]
    %v1817 = vld [vmem:[%s1 + $0x30] sm:$0xff]
    %v1818 = vld [vmem:[%s1 + $0x38] sm:$0xff]
    %v1819 = vld [vmem:[%s1 + $0x40] sm:$0xff]
    %v1820 = vld [vmem:[%s1 + $0x48] sm:$0xff]
    %v1821 = vld [vmem:[%s1 + $0x50] sm:$0xff]
    %v1822 = vld [vmem:[%s1 + $0x58] sm:$0xff]
    %v1823 = vld [vmem:[%s1 + $0x60] sm:$0xff]
    %v1824 = vld [vmem:[%s1 + $0x68] sm:$0xff]
    %v1825 = vld [vmem:[%s1 + $0x70] sm:$0xff]
    %v1826 = vld [vmem:[%s1 + $0x78] sm:$0xff]
    %v1827 = vld [vmem:[%s1 + $0x80] sm:$0xff]
    %v1828 = vld [vmem:[%s1 + $0x88] sm:$0xff]
    %v1829 = vld [vmem:[%s1 + $0x90] sm:$0xff]
    %v1830 = vld [vmem:[%s1 + $0x98] sm:$0xff]
    %v1831 = vld [vmem:[%s1 + $0xa0] sm:$0xff]
    %v1832 = vld [vmem:[%s1 + $0xa8] sm:$0xff]
    %v1833 = vld [vmem:[%s1 + $0xb0] sm:$0xff]
    %v1834 = vld [vmem:[%s1 + $0xb8] sm:$0xff]
    %v1835 = vld [vmem:[%s1 + $0xc0] sm:$0xff]
    %v1836 = vld [vmem:[%s1 + $0xc8] sm:$0xff]
    %v1837 = vld [vmem:[%s1 + $0xd0] sm:$0xff]
    %v1838 = vld [vmem:[%s1 + $0xd8] sm:$0xff]
    %v1839 = vld [vmem:[%s1 + $0xe0] sm:$0xff]
    %v1840 = vld [vmem:[%s1 + $0xe8] sm:$0xff]
    %v1841 = vld [vmem:[%s1 + $0xf0] sm:$0xff]
    %v1842 = vld [vmem:[%s1 + $0xf8] sm:$0xff]
    %v1843 = vld [vmem:[%s1 + $0x100] sm:$0xff]
    %v1844 = vld [vmem:[%s1 + $0x108] sm:$0xff]
    %v1845 = vld [vmem:[%s1 + $0x110] sm:$0xff]
    %v1846 = vld [vmem:[%s1 + $0x118] sm:$0xff]
    %v1847 = vld [vmem:[%s1 + $0x120] sm:$0xff]
    %v1848 = vld [vmem:[%s1 + $0x128] sm:$0xff]
    %v1849 = vld [vmem:[%s1 + $0x130] sm:$0xff]
    %v1850 = vld [vmem:[%s1 + $0x138] sm:$0xff]
    %v1851 = vld [vmem:[%s1 + $0x140] sm:$0xff]
    %v1852 = vld [vmem:[%s1 + $0x148] sm:$0xff]
    %v1853 = vld [vmem:[%s1 + $0x150] sm:$0xff]
    %v1854 = vld [vmem:[%s1 + $0x158] sm:$0xff]
    %v1855 = vld [vmem:[%s1 + $0x160] sm:$0xff]
    %v1856 = vld [vmem:[%s1 + $0x168] sm:$0xff]
    %v1857 = vld [vmem:[%s1 + $0x170] sm:$0xff]
    %v1858 = vld [vmem:[%s1 + $0x178] sm:$0xff]
    %v1859 = vld [vmem:[%s1 + $0x180] sm:$0xff]
    %v1860 = vld [vmem:[%s1 + $0x188] sm:$0xff]
    %v1861 = vld [vmem:[%s1 + $0x190] sm:$0xff]
    %v1862 = vld [vmem:[%s1 + $0x198] sm:$0xff]
    %v1863 = vld [vmem:[%s1 + $0x1a0] sm:$0xff]
    %v1864 = vld [vmem:[%s1 + $0x1a8] sm:$0xff]
    %v1865 = vld [vmem:[%s1 + $0x1b0] sm:$0xff]
    %v1866 = vld [vmem:[%s1 + $0x1b8] sm:$0xff]
    %v1867 = vld [vmem:[%s1 + $0x1c0] sm:$0xff]
    %v1868 = vld [vmem:[%s1 + $0x1c8] sm:$0xff]
    %v1869 = vld [vmem:[%s1 + $0x1d0] sm:$0xff]
    %v1870 = vld [vmem:[%s1 + $0x1d8] sm:$0xff]
    %v1871 = vld [vmem:[%s1 + $0x1e0] sm:$0xff]
    %v1872 = vld [vmem:[%s1 + $0x1e8] sm:$0xff]
    %v1873 = vld [vmem:[%s1 + $0x1f0] sm:$0xff]
    %v1874 = vld [vmem:[%s1 + $0x1f8] sm:$0xff]
    %1875 = vmatprep.subr.mxu0 %v1872
    %1876 = vmatpush1.msra.mxu0 %v1871
    %1877 = vmatprep.subr.mxu0 %v1868
    %1878 = vmatpush1.msra.mxu0 %v1867
    %1879 = vmatprep.subr.mxu0 %v1864
    %1880 = vmatpush1.msra.mxu0 %v1863
    %1881 = vmatprep.subr.mxu0 %v1860
    %1882 = vmatpush1.msra.mxu0 %v1859
    %1883 = vmatprep.subr.mxu0 %v1856
    %1884 = vmatpush1.msra.mxu0 %v1855
    %1885 = vmatprep.subr.mxu0 %v1852
    %1886 = vmatpush1.msra.mxu0 %v1851
    %1887 = vmatprep.subr.mxu0 %v1848
    %1888 = vmatpush1.msra.mxu0 %v1847
    %1889 = vmatprep.subr.mxu0 %v1844
    %1890 = vmatpush1.msra.mxu0 %v1843
    %1891 = vmatprep.subr.mxu0 %v1840
    %1892 = vmatpush1.msra.mxu0 %v1839
    %1893 = vmatprep.subr.mxu0 %v1836
    %1894 = vmatpush1.msra.mxu0 %v1835
    %1895 = vmatprep.subr.mxu0 %v1832
    %1896 = vmatpush1.msra.mxu0 %v1831
    %1897 = vmatprep.subr.mxu0 %v1828
    %1898 = vmatpush1.msra.mxu0 %v1827
    %1899 = vmatprep.subr.mxu0 %v1824
    %1900 = vmatpush1.msra.mxu0 %v1823
    %1901 = vmatprep.subr.mxu0 %v1820
    %1902 = vmatpush1.msra.mxu0 %v1819
    %1903 = vmatprep.subr.mxu0 %v1816
    %1904 = vmatpush1.msra.mxu0 %v1815
    %1905 = vmatprep.subr.mxu0 %v1812
    %1906 = vmatpush1.msra.mxu0 %v1811
    %1907 = vmatprep.subr.mxu0 0.0
    %1908 = vmatpush2.msra.mxu0 0.0
    %1909 = vmatprep.subr.mxu0 0.0
    %1910 = vmatpush2.msra.mxu0 0.0
    %1911 = vmatprep.subr.mxu0 0.0
    %1912 = vmatpush2.msra.mxu0 0.0
    %1913 = vmatprep.subr.mxu0 0.0
    %1914 = vmatpush2.msra.mxu0 0.0
    %1915 = vmatprep.subr.mxu0 0.0
    %1916 = vmatpush2.msra.mxu0 0.0
    %1917 = vmatprep.subr.mxu0 0.0
    %1918 = vmatpush2.msra.mxu0 0.0
    %1919 = vmatprep.subr.mxu0 0.0
    %1920 = vmatpush2.msra.mxu0 0.0
    %1921 = vmatprep.subr.mxu0 0.0
    %1922 = vmatpush2.msra.mxu0 0.0
    %1923 = vmatprep.subr.mxu0 0.0
    %1924 = vmatpush2.msra.mxu0 0.0
    %1925 = vmatprep.subr.mxu0 0.0
    %1926 = vmatpush2.msra.mxu0 0.0
    %1927 = vmatprep.subr.mxu0 0.0
    %1928 = vmatpush2.msra.mxu0 0.0
    %1929 = vmatprep.subr.mxu0 0.0
    %1930 = vmatpush2.msra.mxu0 0.0
    %1931 = vmatprep.subr.mxu0 0.0
    %1932 = vmatpush2.msra.mxu0 0.0
    %1933 = vmatprep.subr.mxu0 0.0
    %1934 = vmatpush2.msra.mxu0 0.0
    %1935 = vmatprep.subr.mxu0 0.0
    %1936 = vmatpush2.msra.mxu0 0.0
    %1937 = vmatprep.subr.mxu0 0.0
    %1938 = vmatpush2.msra.mxu0 0.0
    %1939 = vmatprep.mubr.f32.mxu0 0.0
    %1940 = vmatmul.mubr.f32.gmra.mxu0 %v1810
    %v1941 = vpop.f32.mrf.mxu0
    %v1942 = vadd.f32 0.0, %v1941
    %v1943 = vpop.f32.mrf.mxu0
    %v1944 = vadd.f32 0.0, %v1943
    %1945 = vdwg.mxu0
    %1946 = vmatprep.subr.mxu0 %v1874
    %1947 = vmatpush1.msra.mxu0 %v1873
    %1948 = vmatprep.subr.mxu0 %v1870
    %1949 = vmatpush1.msra.mxu0 %v1869
    %1950 = vmatprep.subr.mxu0 %v1866
    %1951 = vmatpush1.msra.mxu0 %v1865
    %1952 = vmatprep.subr.mxu0 %v1862
    %1953 = vmatpush1.msra.mxu0 %v1861
    %1954 = vmatprep.subr.mxu0 %v1858
    %1955 = vmatpush1.msra.mxu0 %v1857
    %1956 = vmatprep.subr.mxu0 %v1854
    %1957 = vmatpush1.msra.mxu0 %v1853
    %1958 = vmatprep.subr.mxu0 %v1850
    %1959 = vmatpush1.msra.mxu0 %v1849
    %1960 = vmatprep.subr.mxu0 %v1846
    %1961 = vmatpush1.msra.mxu0 %v1845
    %1962 = vmatprep.subr.mxu0 %v1842
    %1963 = vmatpush1.msra.mxu0 %v1841
    %1964 = vmatprep.subr.mxu0 %v1838
    %1965 = vmatpush1.msra.mxu0 %v1837
    %1966 = vmatprep.subr.mxu0 %v1834
    %1967 = vmatpush1.msra.mxu0 %v1833
    %1968 = vmatprep.subr.mxu0 %v1830
    %1969 = vmatpush1.msra.mxu0 %v1829
    %1970 = vmatprep.subr.mxu0 %v1826
    %1971 = vmatpush1.msra.mxu0 %v1825
    %1972 = vmatprep.subr.mxu0 %v1822
    %1973 = vmatpush1.msra.mxu0 %v1821
    %1974 = vmatprep.subr.mxu0 %v1818
    %1975 = vmatpush1.msra.mxu0 %v1817
    %1976 = vmatprep.subr.mxu0 %v1814
    %1977 = vmatpush1.msra.mxu0 %v1813
    %1978 = vmatprep.subr.mxu0 0.0
    %1979 = vmatpush2.msra.mxu0 0.0
    %1980 = vmatprep.subr.mxu0 0.0
    %1981 = vmatpush2.msra.mxu0 0.0
    %1982 = vmatprep.subr.mxu0 0.0
    %1983 = vmatpush2.msra.mxu0 0.0
    %1984 = vmatprep.subr.mxu0 0.0
    %1985 = vmatpush2.msra.mxu0 0.0
    %1986 = vmatprep.subr.mxu0 0.0
    %1987 = vmatpush2.msra.mxu0 0.0
    %1988 = vmatprep.subr.mxu0 0.0
    %1989 = vmatpush2.msra.mxu0 0.0
    %1990 = vmatprep.subr.mxu0 0.0
    %1991 = vmatpush2.msra.mxu0 0.0
    %1992 = vmatprep.subr.mxu0 0.0
    %1993 = vmatpush2.msra.mxu0 0.0
    %1994 = vmatprep.subr.mxu0 0.0
    %1995 = vmatpush2.msra.mxu0 0.0
    %1996 = vmatprep.subr.mxu0 0.0
    %1997 = vmatpush2.msra.mxu0 0.0
    %1998 = vmatprep.subr.mxu0 0.0
    %1999 = vmatpush2.msra.mxu0 0.0
    %2000 = vmatprep.subr.mxu0 0.0
    %2001 = vmatpush2.msra.mxu0 0.0
    %2002 = vmatprep.subr.mxu0 0.0
    %2003 = vmatpush2.msra.mxu0 0.0
    %2004 = vmatprep.subr.mxu0 0.0
    %2005 = vmatpush2.msra.mxu0 0.0
    %2006 = vmatprep.subr.mxu0 0.0
    %2007 = vmatpush2.msra.mxu0 0.0
    %2008 = vmatprep.subr.mxu0 0.0
    %2009 = vmatpush2.msra.mxu0 0.0
    %2010 = vmatprep.mubr.f32.mxu0 0.0
    %2011 = vmatmul.mubr.f32.gmra.mxu0 %v1810
    %v2012 = vpop.f32.mrf.mxu0
    %v2013 = vadd.f32 0.0, %v2012
    %v2014 = vpop.f32.mrf.mxu0
    %v2015 = vadd.f32 0.0, %v2014
    %2016 = vdwg.mxu0
    %v2021 = vcombine.low %v1942, %v1944
    %v2022 = vcombine.low %v2013, %v2015
    %v2024 = vunpack.c.l.s4 1983009808
    %v2025 = vunpack.c.0.s8 %v2024
    %v2026 = vlaneseq
    %v2027 = vshrl.u32 %v2026, 7
    %v2028 = vsub.s32 %v2025, %v2027
    %v2029 = vrot.slane %v2021, %v2028
    %v2031 = vunpack.c.l.s4 1983009808
    %v2032 = vunpack.c.0.s8 %v2031
    %v2033 = vlaneseq
    %v2034 = vshrl.u32 %v2033, 7
    %v2035 = vsub.s32 %v2032, %v2034
    %v2036 = vrot.slane %v2022, %v2035
    %v2037 = vcombine.low %v2029, %v2036
    %v2039 = vadd.f32 %v1809, %v2037
    %v2040 = vxor.u32 %v2039, 2147483648
    %v2041 = vmul.f32 %v2040, 1.442695
    %v2042 = vpow.pop %v2041
    %v2043 = vadd.f32 %v2042, 1.0
    %v2044 = vrcp.pop %v2043
    %v2045 = vmul.f32 1.0, %v2044
    %v2047 = vrot.slane %v2039, 6
    %v2049 = vtanh.pop %v2047
    %v2050 = vld [vmem:[#allocation3] sm:$0x3]
    %v2052 = vrot.slane %v2045, 2
    %v2054 = vmul.f32 %v2052, %v2050
    %v2055 = vmul.f32 %v2045, %v2049
    %v2056 = vadd.f32 %v2054, %v2055
    %v2057 = vtanh.pop %v2056
    %v2058 = vrot.slane %v2045, 4
    %v2060 = vmul.f32 %v2058, %v2057
    %2061 = vst [vmem:[#allocation2] sm:$0x3] %v2060
    %2062 = vst [vmem:[#allocation3] sm:$0x3] %v2056
    // Predicated region
    $region22: #{lstm_forward.1} parent=1 // pred_check
      %p2063 = pneg %p18
    $region23: #{lstm_forward.1} parent=1 // pred_check_branch
      %2065 = sbr.rel (%p2063) target = $region25
    $region24: #{lstm_forward.1} parent=1 // pred_region
      %v2066 = vld [vmem:[#allocation2] sm:$0x3]
      %v2067 = vld [vmem:[%s2] sm:$0xff]
      %v2068 = vld [vmem:[%s2 + $0x8] sm:$0xff]
      %v2069 = vld [vmem:[%s2 + $0x10] sm:$0xff]
      %v2070 = vld [vmem:[%s2 + $0x18] sm:$0xff]
      %v2071 = vld [vmem:[%s2 + $0x20] sm:$0xff]
      %v2072 = vld [vmem:[%s2 + $0x28] sm:$0xff]
      %v2073 = vld [vmem:[%s2 + $0x30] sm:$0xff]
      %v2074 = vld [vmem:[%s2 + $0x38] sm:$0xff]
      %v2075 = vld [vmem:[%s2 + $0x40] sm:$0xff]
      %v2076 = vld [vmem:[%s2 + $0x48] sm:$0xff]
      %v2077 = vld [vmem:[%s2 + $0x50] sm:$0xff]
      %v2078 = vld [vmem:[%s2 + $0x58] sm:$0xff]
      %v2079 = vld [vmem:[%s2 + $0x60] sm:$0xff]
      %v2080 = vld [vmem:[%s2 + $0x68] sm:$0xff]
      %v2081 = vld [vmem:[%s2 + $0x70] sm:$0xff]
      %v2082 = vld [vmem:[%s2 + $0x78] sm:$0xff]
      %v2083 = vld [vmem:[%s3] sm:$0x1]
      %v2085 = vlaneseq
      %v2086 = vshrl.u32 %v2085, 7
      %v2087 = vsub.s32 0, %v2086
      %v2088 = vrot.slane %v2083, %v2087
      %2090 = vmatprep.subr.mxu0 0.0
      %2091 = vmatpush1.msra.mxu0 %v2082
      %2092 = vmatprep.subr.mxu0 0.0
      %2093 = vmatpush1.msra.mxu0 %v2081
      %2094 = vmatprep.subr.mxu0 0.0
      %2095 = vmatpush1.msra.mxu0 %v2080
      %2096 = vmatprep.subr.mxu0 0.0
      %2097 = vmatpush1.msra.mxu0 %v2079
      %2098 = vmatprep.subr.mxu0 0.0
      %2099 = vmatpush1.msra.mxu0 %v2078
      %2100 = vmatprep.subr.mxu0 0.0
      %2101 = vmatpush1.msra.mxu0 %v2077
      %2102 = vmatprep.subr.mxu0 0.0
      %2103 = vmatpush1.msra.mxu0 %v2076
      %2104 = vmatprep.subr.mxu0 0.0
      %2105 = vmatpush1.msra.mxu0 %v2075
      %2106 = vmatprep.subr.mxu0 0.0
      %2107 = vmatpush1.msra.mxu0 %v2074
      %2108 = vmatprep.subr.mxu0 0.0
      %2109 = vmatpush1.msra.mxu0 %v2073
      %2110 = vmatprep.subr.mxu0 0.0
      %2111 = vmatpush1.msra.mxu0 %v2072
      %2112 = vmatprep.subr.mxu0 0.0
      %2113 = vmatpush1.msra.mxu0 %v2071
      %2114 = vmatprep.subr.mxu0 0.0
      %2115 = vmatpush1.msra.mxu0 %v2070
      %2116 = vmatprep.subr.mxu0 0.0
      %2117 = vmatpush1.msra.mxu0 %v2069
      %2118 = vmatprep.subr.mxu0 0.0
      %2119 = vmatpush1.msra.mxu0 %v2068
      %2120 = vmatprep.subr.mxu0 0.0
      %2121 = vmatpush1.msra.mxu0 %v2067
      %2122 = vmatprep.subr.mxu0 0.0
      %2123 = vmatpush2.msra.mxu0 0.0
      %2124 = vmatprep.subr.mxu0 0.0
      %2125 = vmatpush2.msra.mxu0 0.0
      %2126 = vmatprep.subr.mxu0 0.0
      %2127 = vmatpush2.msra.mxu0 0.0
      %2128 = vmatprep.subr.mxu0 0.0
      %2129 = vmatpush2.msra.mxu0 0.0
      %2130 = vmatprep.subr.mxu0 0.0
      %2131 = vmatpush2.msra.mxu0 0.0
      %2132 = vmatprep.subr.mxu0 0.0
      %2133 = vmatpush2.msra.mxu0 0.0
      %2134 = vmatprep.subr.mxu0 0.0
      %2135 = vmatpush2.msra.mxu0 0.0
      %2136 = vmatprep.subr.mxu0 0.0
      %2137 = vmatpush2.msra.mxu0 0.0
      %2138 = vmatprep.subr.mxu0 0.0
      %2139 = vmatpush2.msra.mxu0 0.0
      %2140 = vmatprep.subr.mxu0 0.0
      %2141 = vmatpush2.msra.mxu0 0.0
      %2142 = vmatprep.subr.mxu0 0.0
      %2143 = vmatpush2.msra.mxu0 0.0
      %2144 = vmatprep.subr.mxu0 0.0
      %2145 = vmatpush2.msra.mxu0 0.0
      %2146 = vmatprep.subr.mxu0 0.0
      %2147 = vmatpush2.msra.mxu0 0.0
      %2148 = vmatprep.subr.mxu0 0.0
      %2149 = vmatpush2.msra.mxu0 0.0
      %2150 = vmatprep.subr.mxu0 0.0
      %2151 = vmatpush2.msra.mxu0 0.0
      %2152 = vmatprep.subr.mxu0 0.0
      %2153 = vmatpush2.msra.mxu0 0.0
      %2154 = vmatprep.mubr.f32.mxu0 0.0
      %2155 = vmatmul.mubr.f32.gmra.mxu0 %v2066
      %v2156 = vpop.f32.mrf.mxu0
      %v2157 = vadd.f32 %v2088, %v2156
      %v2158 = vpop.f32.mrf.mxu0
      %2159 = vdwg.mxu0
      %v2160 = vxor.u32 %v2157, 2147483648
      %v2161 = vmul.f32 %v2160, 1.442695
      %v2162 = vpow.pop %v2161
      %v2163 = vadd.f32 %v2162, 1.0
      %v2164 = vrcp.pop %v2163
      %v2165 = vmul.f32 1.0, %v2164
      %vm2166 = vcmask 9216
      %2167 = vst.msk [vmem:[#allocation4] sm:$0x3] %vm2166, %v2165
    $region25: #{lstm_forward.1} parent=1 // pred_fallthru
      _
    // Predicated region
    $region26: #{lstm_forward.1} parent=1 // pred_check
      _
    $region27: #{lstm_forward.1} parent=1 // pred_check_branch
      %2169 = sbr.rel (0) target = $region29
    $region28: #{lstm_forward.1} parent=1 // pred_region
      %s2171 = ssub.s32 32, 32
      %2172 = vsyncadd [#allocation5], %s2171
      %s2174 = sshll.u32 [#allocation4], 4
      %s2175 = int_to_ptr.vmem [resolvable:$true] %s2174
      %2177 = dma.vmem_to_hbm [thread:$0]  %s2175, 32, %s4, [#allocation5]
    $region29: #{lstm_forward.1} parent=1 // pred_fallthru
      _
    // Predicated region
    $region30: #{lstm_forward.1} parent=1 // pred_check
      _
    $region31: #{lstm_forward.1} parent=1 // pred_check_branch
      %2179 = sbr.rel (0) target = $region33
    $region32: #{lstm_forward.1} parent=1 // pred_region
      %2180 = dma.done [#allocation5], 32
    $region33: #{lstm_forward.1} parent=1 // pred_fallthru
      _
    %2181 = vsyncpa [#allocation5], 1

</llo_original>
